<compile_context>
chip_gen: v7x
topology: tpu7x:2x2x1
jax: 0.10.0
libtpu: 0.0.40
codegen_flags: <defaults>
</compile_context>

<pallas_src>
import math
from functools import partial

import jax
import jax.numpy as jnp
from jax import lax
from jax.experimental import pallas as pl
from jax.experimental.pallas import tpu as pltpu

# Hyperparameters (H): bert_n_emb=32, bert_n_head=4, latent_shape=(4,4) -> T=16,
# sampler='autoregressive' -> causal=True, attn_pdrop=resid_pdrop=0 (eval).
N_HEAD = 4


def attn_kernel(x_ref, wqkv_ref, bqkv_ref, wp_ref, bp_ref,
                y_ref, k_ref, v_ref, *, B, T, n_head):
    BT, C = x_ref.shape                       # (B*T, C)
    hd = C // n_head

    xf = x_ref[...]                           # (B*T, C)

    # Fused QKV projection: one MXU matmul with a 3C-wide (96-lane) result.
    # The 1/sqrt(hd) attention scale was folded into the q-part of wqkv/bqkv.
    qkv = (jnp.dot(xf, wqkv_ref[...], preferred_element_type=jnp.float32)
           + bqkv_ref[0])                     # (B*T, 3C)

    q = qkv[:, 0 * C:1 * C]                   # pre-scaled
    k = qkv[:, 1 * C:2 * C]
    v = qkv[:, 2 * C:3 * C]

    # Lane-dense "present" outputs: single (B*T, C) stores; head reshape in wrapper.
    k_ref[...] = k.astype(k_ref.dtype)
    v_ref[...] = v.astype(v_ref.dtype)

    # Additive causal mask (0 / -1e30), built once, reused for every batch/head.
    row = lax.broadcasted_iota(jnp.int32, (T, T), 0)
    col = lax.broadcasted_iota(jnp.int32, (T, T), 1)
    mask_bias = jnp.where(col <= row, 0.0, -1e30).astype(jnp.float32)

    wp = wp_ref[...]                          # (C, C)
    bp = bp_ref[0]                            # (C,)

    for b in range(B):                        # static unrolled (B is tiny)
        r = slice(b * T, (b + 1) * T)
        y_acc = jnp.zeros((T, C), jnp.float32)
        for h in range(n_head):               # static unrolled over heads
            cs = slice(h * hd, (h + 1) * hd)
            qh = q[r, cs]                     # (T, hd)
            kh = k[r, cs]
            vh = v[r, cs]
            # q @ k^T contracted on the head dim, no transposed operand materialized.
            att = lax.dot_general(
                qh, kh,
                dimension_numbers=(((1,), (1,)), ((), ())),
                preferred_element_type=jnp.float32)           # (T, T)
            att = jax.nn.softmax(att + mask_bias, axis=-1)
            # TODO(synk): attn_drop / resid_drop are identity here (eval mode / p=0).
            hout = jnp.dot(att, vh, preferred_element_type=jnp.float32)   # (T, hd)
            # Fuse the output projection per head (no concat of narrow slices).
            y_acc = y_acc + jnp.dot(hout, wp[cs, :],
                                    preferred_element_type=jnp.float32)
        y_ref[r, :] = (y_acc + bp).astype(y_ref.dtype)


def causal_self_attention(x, params):
    """Wrapper: params = (wq, bq, wk, bk, wv, bv, wp, bp) with PyTorch Linear
    convention W: (out, in), b: (out,)."""
    B, T, C = x.shape
    nh = N_HEAD
    hd = C // nh
    wq, bq, wk, bk, wv, bv, wp, bp = params

    scale = 1.0 / math.sqrt(hd)
    # Fold the attention scale into the query projection; transpose to (C_in, C_out)
    # and fuse q/k/v into a single (C, 3C) matrix + (1, 3C) bias.
    wqkv = jnp.concatenate([(wq * scale).T, wk.T, wv.T], axis=1)    # (C, 3C)
    bqkv = jnp.concatenate([bq * scale, bk, bv]).reshape(1, 3 * C)  # (1, 3C)
    wp_t = wp.T                                                     # (C, C)
    bp2 = bp.reshape(1, C)

    xf = x.reshape(B * T, C)                  # fold batch into the sublane dim

    full2d = lambda shape: pl.BlockSpec(shape, lambda i: (0, 0))

    y_flat, k_flat, v_flat = pl.pallas_call(
        partial(attn_kernel, B=B, T=T, n_head=nh),
        grid=(1,),                            # single step: whole problem in VMEM
        in_specs=[
            full2d((B * T, C)),               # x (flattened)
            full2d((C, 3 * C)),               # fused qkv weight
            full2d((1, 3 * C)),               # fused qkv bias
            full2d((C, C)),                   # proj weight
            full2d((1, C)),                   # proj bias
        ],
        out_specs=(
            full2d((B * T, C)),               # y
            full2d((B * T, C)),               # k slab
            full2d((B * T, C)),               # v slab
        ),
        out_shape=(
            jax.ShapeDtypeStruct((B * T, C), x.dtype),
            jax.ShapeDtypeStruct((B * T, C), x.dtype),
            jax.ShapeDtypeStruct((B * T, C), x.dtype),
        ),
    )(xf, wqkv, bqkv, wp_t, bp2)

    y = y_flat.reshape(B, T, C)
    k_out = k_flat.reshape(B, T, nh, hd).transpose(0, 2, 1, 3)
    v_out = v_flat.reshape(B, T, nh, hd).transpose(0, 2, 1, 3)
    present = jnp.stack([k_out, v_out])       # (2, B, n_head, T, hd)
    return y, present


def ref_causal_self_attention(x, params):
    """Pure-JAX reference mirroring the PyTorch forward (eval mode)."""
    wq, bq, wk, bk, wv, bv, wp, bp = params
    B, T, C = x.shape
    nh, hd = N_HEAD, C // N_HEAD

    def lin(a, w, b):
        return a @ w.T + b

    k = lin(x, wk, bk).reshape(B, T, nh, hd).transpose(0, 2, 1, 3)
    q = lin(x, wq, bq).reshape(B, T, nh, hd).transpose(0, 2, 1, 3)
    v = lin(x, wv, bv).reshape(B, T, nh, hd).transpose(0, 2, 1, 3)
    present = jnp.stack([k, v])
    att = (q @ jnp.swapaxes(k, -2, -1)) * (1.0 / math.sqrt(hd))
    mask = jnp.tril(jnp.ones((T, T), dtype=x.dtype))
    att = jnp.where(mask[None, None] == 0, -jnp.inf, att)
    att = jax.nn.softmax(att, axis=-1)
    y = (att @ v).transpose(0, 2, 1, 3).reshape(B, T, C)
    y = lin(y, wp, bp)
    return y, present


if __name__ == "__main__":
    # H.bert_n_emb=32, H.bert_n_head=4, latent_shape=(4,4) -> block_size T=16, B=2
    B, T, C = 2, 16, 32

    key = jax.random.PRNGKey(0)
    keys = jax.random.split(key, 9)
    bound = 1.0 / math.sqrt(C)   # PyTorch nn.Linear default init range

    def mk_w(k):
        return jax.random.uniform(k, (C, C), jnp.float32, -bound, bound)

    def mk_b(k):
        return jax.random.uniform(k, (C,), jnp.float32, -bound, bound)

    params = (
        mk_w(keys[0]), mk_b(keys[1]),   # query
        mk_w(keys[2]), mk_b(keys[3]),   # key
        mk_w(keys[4]), mk_b(keys[5]),   # value
        mk_w(keys[6]), mk_b(keys[7]),   # proj
    )
    x = jax.random.normal(keys[8], (B, T, C), jnp.float32)

    y, present = causal_self_attention(x, params)
    jax.block_until_ready((y, present))

    y_ref, present_ref = ref_causal_self_attention(x, params)
    assert jnp.allclose(y, y_ref, rtol=1e-4, atol=1e-4), "y mismatch"
    assert jnp.allclose(present, present_ref, rtol=1e-4, atol=1e-4), "present mismatch"

    print("KERNEL_OK")
</pallas_src>

<mosaic_0001>
module attributes {stable_mosaic.version = 11 : i64} {
  func.func @attn_kernel(%arg0: i32, %arg1: memref<32x32xf32, #tpu.memory_space<vmem>>, %arg2: memref<32x96xf32, #tpu.memory_space<vmem>>, %arg3: memref<1x96xf32, #tpu.memory_space<vmem>>, %arg4: memref<32x32xf32, #tpu.memory_space<vmem>>, %arg5: memref<1x32xf32, #tpu.memory_space<vmem>>, %arg6: memref<32x32xf32, #tpu.memory_space<vmem>>, %arg7: memref<32x32xf32, #tpu.memory_space<vmem>>, %arg8: memref<32x32xf32, #tpu.memory_space<vmem>>) attributes {dimension_semantics = [#tpu.dimension_semantics<arbitrary>], iteration_bounds = array<i64: 1>, scalar_prefetch = 0 : i64, scratch_operands = 0 : i64, tpu.core_type = #tpu.core_type<tc>, window_params = [{pipeline_mode = #tpu.pipeline_mode<synchronous>, transform_indices = @transform_0, window_bounds = array<i64: 32, 32>}, {pipeline_mode = #tpu.pipeline_mode<synchronous>, transform_indices = @transform_1, window_bounds = array<i64: 32, 96>}, {pipeline_mode = #tpu.pipeline_mode<synchronous>, transform_indices = @transform_2, window_bounds = array<i64: 1, 96>}, {pipeline_mode = #tpu.pipeline_mode<synchronous>, transform_indices = @transform_3, window_bounds = array<i64: 32, 32>}, {pipeline_mode = #tpu.pipeline_mode<synchronous>, transform_indices = @transform_4, window_bounds = array<i64: 1, 32>}, {pipeline_mode = #tpu.pipeline_mode<synchronous>, transform_indices = @transform_5, window_bounds = array<i64: 32, 32>}, {pipeline_mode = #tpu.pipeline_mode<synchronous>, transform_indices = @transform_6, window_bounds = array<i64: 32, 32>}, {pipeline_mode = #tpu.pipeline_mode<synchronous>, transform_indices = @transform_7, window_bounds = array<i64: 32, 32>}]} {
    %c0 = arith.constant 0 : index
    %c0_0 = arith.constant 0 : index
    %0 = vector.load %arg1[%c0, %c0_0] : memref<32x32xf32, #tpu.memory_space<vmem>>, vector<32x32xf32>
    %c0_1 = arith.constant 0 : index
    %c0_2 = arith.constant 0 : index
    %1 = vector.load %arg2[%c0_1, %c0_2] : memref<32x96xf32, #tpu.memory_space<vmem>>, vector<32x96xf32>
    %cst = arith.constant dense<0.000000e+00> : vector<32x96xf32>
    %2 = tpu.matmul %0, %1, %cst {dimension_numbers = #tpu.dot_dimension_numbers<[1], [0], [0], [1], [0, 0, 1, 1], [], []>} : vector<32x32xf32>, vector<32x96xf32>, vector<32x96xf32> -> vector<32x96xf32>
    %c0_3 = arith.constant 0 : index
    %c0_4 = arith.constant 0 : index
    %3 = vector.load %arg3[%c0_3, %c0_4] : memref<1x96xf32, #tpu.memory_space<vmem>>, vector<1x96xf32>
    %4 = vector.shape_cast %3 : vector<1x96xf32> to vector<96xf32>
    %5 = vector.shape_cast %4 : vector<96xf32> to vector<1x96xf32>
    %6 = vector.broadcast %5 : vector<1x96xf32> to vector<32x96xf32>
    %7 = arith.addf %2, %6 : vector<32x96xf32>
    %8 = vector.extract_strided_slice %7 {offsets = [0, 0], sizes = [32, 32], strides = [1, 1]} : vector<32x96xf32> to vector<32x32xf32>
    %9 = vector.extract_strided_slice %7 {offsets = [0, 32], sizes = [32, 32], strides = [1, 1]} : vector<32x96xf32> to vector<32x32xf32>
    %10 = vector.extract_strided_slice %7 {offsets = [0, 64], sizes = [32, 32], strides = [1, 1]} : vector<32x96xf32> to vector<32x32xf32>
    %c0_5 = arith.constant 0 : index
    %c0_6 = arith.constant 0 : index
    %11 = vector.load %arg7[%c0_5, %c0_6] : memref<32x32xf32, #tpu.memory_space<vmem>>, vector<32x32xf32>
    tpu.vector_store %arg7[%c0_5, %c0_6], %9 {strides = array<i32>} : memref<32x32xf32, #tpu.memory_space<vmem>>, vector<32x32xf32>,
    %c0_7 = arith.constant 0 : index
    %c0_8 = arith.constant 0 : index
    %12 = vector.load %arg8[%c0_7, %c0_8] : memref<32x32xf32, #tpu.memory_space<vmem>>, vector<32x32xf32>
    tpu.vector_store %arg8[%c0_7, %c0_8], %10 {strides = array<i32>} : memref<32x32xf32, #tpu.memory_space<vmem>>, vector<32x32xf32>,
    %13 = tpu.iota {dimensions = array<i32: 0>} : vector<16x16xi32>
    %14 = tpu.iota {dimensions = array<i32: 1>} : vector<16x16xi32>
    %15 = arith.cmpi sle, %14, %13 : vector<16x16xi32>
    %cst_9 = arith.constant 0.000000e+00 : f32
    %cst_10 = arith.constant -1.000000e+30 : f32
    %16 = vector.broadcast %cst_9 : f32 to vector<16x16xf32>
    %17 = vector.broadcast %cst_10 : f32 to vector<16x16xf32>
    %18 = arith.select %15, %16, %17 : vector<16x16xi1>, vector<16x16xf32>
    %c0_11 = arith.constant 0 : index
    %c0_12 = arith.constant 0 : index
    %19 = vector.load %arg4[%c0_11, %c0_12] : memref<32x32xf32, #tpu.memory_space<vmem>>, vector<32x32xf32>
    %c0_13 = arith.constant 0 : index
    %c0_14 = arith.constant 0 : index
    %20 = vector.load %arg5[%c0_13, %c0_14] : memref<1x32xf32, #tpu.memory_space<vmem>>, vector<1x32xf32>
    %21 = vector.shape_cast %20 : vector<1x32xf32> to vector<32xf32>
    %cst_15 = arith.constant 0.000000e+00 : f32
    %22 = vector.broadcast %cst_15 : f32 to vector<16x32xf32>
    %23 = vector.extract_strided_slice %8 {offsets = [0, 0], sizes = [16, 8], strides = [1, 1]} : vector<32x32xf32> to vector<16x8xf32>
    %24 = vector.extract_strided_slice %9 {offsets = [0, 0], sizes = [16, 8], strides = [1, 1]} : vector<32x32xf32> to vector<16x8xf32>
    %25 = vector.extract_strided_slice %10 {offsets = [0, 0], sizes = [16, 8], strides = [1, 1]} : vector<32x32xf32> to vector<16x8xf32>
    %cst_16 = arith.constant dense<0.000000e+00> : vector<16x16xf32>
    %26 = tpu.matmul %23, %24, %cst_16 {dimension_numbers = #tpu.dot_dimension_numbers<[1], [1], [0], [0], [0, 0, 1, 0], [], []>} : vector<16x8xf32>, vector<16x8xf32>, vector<16x16xf32> -> vector<16x16xf32>
    %27 = arith.addf %26, %18 : vector<16x16xf32>
    %cst_17 = arith.constant dense<0xFF800000> : vector<16xf32>
    %28 = vector.multi_reduction <maximumf>, %27, %cst_17 [1] : vector<16x16xf32> to vector<16xf32>
    %cst_18 = arith.constant 0xFF800000 : f32
    %29 = vector.broadcast %cst_18 : f32 to vector<16xf32>
    %30 = arith.maximumf %29, %28 : vector<16xf32>
    %31 = vector.shape_cast %30 : vector<16xf32> to vector<16x1xf32>
    %32 = vector.broadcast %31 : vector<16x1xf32> to vector<16x16xf32>
    %33 = arith.subf %27, %32 : vector<16x16xf32>
    %34 = math.exp %33 : vector<16x16xf32>
    %cst_19 = arith.constant dense<0.000000e+00> : vector<16xf32>
    %35 = vector.multi_reduction <add>, %34, %cst_19 [1] : vector<16x16xf32> to vector<16xf32>
    %36 = vector.shape_cast %35 : vector<16xf32> to vector<16x1xf32>
    %37 = vector.broadcast %36 : vector<16x1xf32> to vector<16x16xf32>
    %38 = arith.divf %34, %37 : vector<16x16xf32>
    %cst_20 = arith.constant dense<0.000000e+00> : vector<16x8xf32>
    %39 = tpu.matmul %38, %25, %cst_20 {dimension_numbers = #tpu.dot_dimension_numbers<[1], [0], [0], [1], [0, 0, 1, 1], [], []>} : vector<16x16xf32>, vector<16x8xf32>, vector<16x8xf32> -> vector<16x8xf32>
    %40 = vector.extract_strided_slice %19 {offsets = [0, 0], sizes = [8, 32], strides = [1, 1]} : vector<32x32xf32> to vector<8x32xf32>
    %cst_21 = arith.constant dense<0.000000e+00> : vector<16x32xf32>
    %41 = tpu.matmul %39, %40, %cst_21 {dimension_numbers = #tpu.dot_dimension_numbers<[1], [0], [0], [1], [0, 0, 1, 1], [], []>} : vector<16x8xf32>, vector<8x32xf32>, vector<16x32xf32> -> vector<16x32xf32>
    %42 = arith.addf %22, %41 : vector<16x32xf32>
    %43 = vector.extract_strided_slice %8 {offsets = [0, 8], sizes = [16, 8], strides = [1, 1]} : vector<32x32xf32> to vector<16x8xf32>
    %44 = vector.extract_strided_slice %9 {offsets = [0, 8], sizes = [16, 8], strides = [1, 1]} : vector<32x32xf32> to vector<16x8xf32>
    %45 = vector.extract_strided_slice %10 {offsets = [0, 8], sizes = [16, 8], strides = [1, 1]} : vector<32x32xf32> to vector<16x8xf32>
    %cst_22 = arith.constant dense<0.000000e+00> : vector<16x16xf32>
    %46 = tpu.matmul %43, %44, %cst_22 {dimension_numbers = #tpu.dot_dimension_numbers<[1], [1], [0], [0], [0, 0, 1, 0], [], []>} : vector<16x8xf32>, vector<16x8xf32>, vector<16x16xf32> -> vector<16x16xf32>
    %47 = arith.addf %46, %18 : vector<16x16xf32>
    %cst_23 = arith.constant dense<0xFF800000> : vector<16xf32>
    %48 = vector.multi_reduction <maximumf>, %47, %cst_23 [1] : vector<16x16xf32> to vector<16xf32>
    %cst_24 = arith.constant 0xFF800000 : f32
    %49 = vector.broadcast %cst_24 : f32 to vector<16xf32>
    %50 = arith.maximumf %49, %48 : vector<16xf32>
    %51 = vector.shape_cast %50 : vector<16xf32> to vector<16x1xf32>
    %52 = vector.broadcast %51 : vector<16x1xf32> to vector<16x16xf32>
    %53 = arith.subf %47, %52 : vector<16x16xf32>
    %54 = math.exp %53 : vector<16x16xf32>
    %cst_25 = arith.constant dense<0.000000e+00> : vector<16xf32>
    %55 = vector.multi_reduction <add>, %54, %cst_25 [1] : vector<16x16xf32> to vector<16xf32>
    %56 = vector.shape_cast %55 : vector<16xf32> to vector<16x1xf32>
    %57 = vector.broadcast %56 : vector<16x1xf32> to vector<16x16xf32>
    %58 = arith.divf %54, %57 : vector<16x16xf32>
    %cst_26 = arith.constant dense<0.000000e+00> : vector<16x8xf32>
    %59 = tpu.matmul %58, %45, %cst_26 {dimension_numbers = #tpu.dot_dimension_numbers<[1], [0], [0], [1], [0, 0, 1, 1], [], []>} : vector<16x16xf32>, vector<16x8xf32>, vector<16x8xf32> -> vector<16x8xf32>
    %60 = vector.extract_strided_slice %19 {offsets = [8, 0], sizes = [8, 32], strides = [1, 1]} : vector<32x32xf32> to vector<8x32xf32>
    %cst_27 = arith.constant dense<0.000000e+00> : vector<16x32xf32>
    %61 = tpu.matmul %59, %60, %cst_27 {dimension_numbers = #tpu.dot_dimension_numbers<[1], [0], [0], [1], [0, 0, 1, 1], [], []>} : vector<16x8xf32>, vector<8x32xf32>, vector<16x32xf32> -> vector<16x32xf32>
    %62 = arith.addf %42, %61 : vector<16x32xf32>
    %63 = vector.extract_strided_slice %8 {offsets = [0, 16], sizes = [16, 8], strides = [1, 1]} : vector<32x32xf32> to vector<16x8xf32>
    %64 = vector.extract_strided_slice %9 {offsets = [0, 16], sizes = [16, 8], strides = [1, 1]} : vector<32x32xf32> to vector<16x8xf32>
    %65 = vector.extract_strided_slice %10 {offsets = [0, 16], sizes = [16, 8], strides = [1, 1]} : vector<32x32xf32> to vector<16x8xf32>
    %cst_28 = arith.constant dense<0.000000e+00> : vector<16x16xf32>
    %66 = tpu.matmul %63, %64, %cst_28 {dimension_numbers = #tpu.dot_dimension_numbers<[1], [1], [0], [0], [0, 0, 1, 0], [], []>} : vector<16x8xf32>, vector<16x8xf32>, vector<16x16xf32> -> vector<16x16xf32>
    %67 = arith.addf %66, %18 : vector<16x16xf32>
    %cst_29 = arith.constant dense<0xFF800000> : vector<16xf32>
    %68 = vector.multi_reduction <maximumf>, %67, %cst_29 [1] : vector<16x16xf32> to vector<16xf32>
    %cst_30 = arith.constant 0xFF800000 : f32
    %69 = vector.broadcast %cst_30 : f32 to vector<16xf32>
    %70 = arith.maximumf %69, %68 : vector<16xf32>
    %71 = vector.shape_cast %70 : vector<16xf32> to vector<16x1xf32>
    %72 = vector.broadcast %71 : vector<16x1xf32> to vector<16x16xf32>
    %73 = arith.subf %67, %72 : vector<16x16xf32>
    %74 = math.exp %73 : vector<16x16xf32>
    %cst_31 = arith.constant dense<0.000000e+00> : vector<16xf32>
    %75 = vector.multi_reduction <add>, %74, %cst_31 [1] : vector<16x16xf32> to vector<16xf32>
    %76 = vector.shape_cast %75 : vector<16xf32> to vector<16x1xf32>
    %77 = vector.broadcast %76 : vector<16x1xf32> to vector<16x16xf32>
    %78 = arith.divf %74, %77 : vector<16x16xf32>
    %cst_32 = arith.constant dense<0.000000e+00> : vector<16x8xf32>
    %79 = tpu.matmul %78, %65, %cst_32 {dimension_numbers = #tpu.dot_dimension_numbers<[1], [0], [0], [1], [0, 0, 1, 1], [], []>} : vector<16x16xf32>, vector<16x8xf32>, vector<16x8xf32> -> vector<16x8xf32>
    %80 = vector.extract_strided_slice %19 {offsets = [16, 0], sizes = [8, 32], strides = [1, 1]} : vector<32x32xf32> to vector<8x32xf32>
    %cst_33 = arith.constant dense<0.000000e+00> : vector<16x32xf32>
    %81 = tpu.matmul %79, %80, %cst_33 {dimension_numbers = #tpu.dot_dimension_numbers<[1], [0], [0], [1], [0, 0, 1, 1], [], []>} : vector<16x8xf32>, vector<8x32xf32>, vector<16x32xf32> -> vector<16x32xf32>
    %82 = arith.addf %62, %81 : vector<16x32xf32>
    %83 = vector.extract_strided_slice %8 {offsets = [0, 24], sizes = [16, 8], strides = [1, 1]} : vector<32x32xf32> to vector<16x8xf32>
    %84 = vector.extract_strided_slice %9 {offsets = [0, 24], sizes = [16, 8], strides = [1, 1]} : vector<32x32xf32> to vector<16x8xf32>
    %85 = vector.extract_strided_slice %10 {offsets = [0, 24], sizes = [16, 8], strides = [1, 1]} : vector<32x32xf32> to vector<16x8xf32>
    %cst_34 = arith.constant dense<0.000000e+00> : vector<16x16xf32>
    %86 = tpu.matmul %83, %84, %cst_34 {dimension_numbers = #tpu.dot_dimension_numbers<[1], [1], [0], [0], [0, 0, 1, 0], [], []>} : vector<16x8xf32>, vector<16x8xf32>, vector<16x16xf32> -> vector<16x16xf32>
    %87 = arith.addf %86, %18 : vector<16x16xf32>
    %cst_35 = arith.constant dense<0xFF800000> : vector<16xf32>
    %88 = vector.multi_reduction <maximumf>, %87, %cst_35 [1] : vector<16x16xf32> to vector<16xf32>
    %cst_36 = arith.constant 0xFF800000 : f32
    %89 = vector.broadcast %cst_36 : f32 to vector<16xf32>
    %90 = arith.maximumf %89, %88 : vector<16xf32>
    %91 = vector.shape_cast %90 : vector<16xf32> to vector<16x1xf32>
    %92 = vector.broadcast %91 : vector<16x1xf32> to vector<16x16xf32>
    %93 = arith.subf %87, %92 : vector<16x16xf32>
    %94 = math.exp %93 : vector<16x16xf32>
    %cst_37 = arith.constant dense<0.000000e+00> : vector<16xf32>
    %95 = vector.multi_reduction <add>, %94, %cst_37 [1] : vector<16x16xf32> to vector<16xf32>
    %96 = vector.shape_cast %95 : vector<16xf32> to vector<16x1xf32>
    %97 = vector.broadcast %96 : vector<16x1xf32> to vector<16x16xf32>
    %98 = arith.divf %94, %97 : vector<16x16xf32>
    %cst_38 = arith.constant dense<0.000000e+00> : vector<16x8xf32>
    %99 = tpu.matmul %98, %85, %cst_38 {dimension_numbers = #tpu.dot_dimension_numbers<[1], [0], [0], [1], [0, 0, 1, 1], [], []>} : vector<16x16xf32>, vector<16x8xf32>, vector<16x8xf32> -> vector<16x8xf32>
    %100 = vector.extract_strided_slice %19 {offsets = [24, 0], sizes = [8, 32], strides = [1, 1]} : vector<32x32xf32> to vector<8x32xf32>
    %cst_39 = arith.constant dense<0.000000e+00> : vector<16x32xf32>
    %101 = tpu.matmul %99, %100, %cst_39 {dimension_numbers = #tpu.dot_dimension_numbers<[1], [0], [0], [1], [0, 0, 1, 1], [], []>} : vector<16x8xf32>, vector<8x32xf32>, vector<16x32xf32> -> vector<16x32xf32>
    %102 = arith.addf %82, %101 : vector<16x32xf32>
    %103 = vector.shape_cast %21 : vector<32xf32> to vector<1x32xf32>
    %104 = vector.broadcast %103 : vector<1x32xf32> to vector<16x32xf32>
    %105 = arith.addf %102, %104 : vector<16x32xf32>
    %c0_40 = arith.constant 0 : index
    %c0_41 = arith.constant 0 : index
    %106 = vector.load %arg6[%c0_40, %c0_41] : memref<32x32xf32, #tpu.memory_space<vmem>>, vector<16x32xf32>
    tpu.vector_store %arg6[%c0_40, %c0_41], %105 {strides = array<i32>} : memref<32x32xf32, #tpu.memory_space<vmem>>, vector<16x32xf32>,
    %cst_42 = arith.constant 0.000000e+00 : f32
    %107 = vector.broadcast %cst_42 : f32 to vector<16x32xf32>
    %108 = vector.extract_strided_slice %8 {offsets = [16, 0], sizes = [16, 8], strides = [1, 1]} : vector<32x32xf32> to vector<16x8xf32>
    %109 = vector.extract_strided_slice %9 {offsets = [16, 0], sizes = [16, 8], strides = [1, 1]} : vector<32x32xf32> to vector<16x8xf32>
    %110 = vector.extract_strided_slice %10 {offsets = [16, 0], sizes = [16, 8], strides = [1, 1]} : vector<32x32xf32> to vector<16x8xf32>
    %cst_43 = arith.constant dense<0.000000e+00> : vector<16x16xf32>
    %111 = tpu.matmul %108, %109, %cst_43 {dimension_numbers = #tpu.dot_dimension_numbers<[1], [1], [0], [0], [0, 0, 1, 0], [], []>} : vector<16x8xf32>, vector<16x8xf32>, vector<16x16xf32> -> vector<16x16xf32>
    %112 = arith.addf %111, %18 : vector<16x16xf32>
    %cst_44 = arith.constant dense<0xFF800000> : vector<16xf32>
    %113 = vector.multi_reduction <maximumf>, %112, %cst_44 [1] : vector<16x16xf32> to vector<16xf32>
    %cst_45 = arith.constant 0xFF800000 : f32
    %114 = vector.broadcast %cst_45 : f32 to vector<16xf32>
    %115 = arith.maximumf %114, %113 : vector<16xf32>
    %116 = vector.shape_cast %115 : vector<16xf32> to vector<16x1xf32>
    %117 = vector.broadcast %116 : vector<16x1xf32> to vector<16x16xf32>
    %118 = arith.subf %112, %117 : vector<16x16xf32>
    %119 = math.exp %118 : vector<16x16xf32>
    %cst_46 = arith.constant dense<0.000000e+00> : vector<16xf32>
    %120 = vector.multi_reduction <add>, %119, %cst_46 [1] : vector<16x16xf32> to vector<16xf32>
    %121 = vector.shape_cast %120 : vector<16xf32> to vector<16x1xf32>
    %122 = vector.broadcast %121 : vector<16x1xf32> to vector<16x16xf32>
    %123 = arith.divf %119, %122 : vector<16x16xf32>
    %cst_47 = arith.constant dense<0.000000e+00> : vector<16x8xf32>
    %124 = tpu.matmul %123, %110, %cst_47 {dimension_numbers = #tpu.dot_dimension_numbers<[1], [0], [0], [1], [0, 0, 1, 1], [], []>} : vector<16x16xf32>, vector<16x8xf32>, vector<16x8xf32> -> vector<16x8xf32>
    %125 = vector.extract_strided_slice %19 {offsets = [0, 0], sizes = [8, 32], strides = [1, 1]} : vector<32x32xf32> to vector<8x32xf32>
    %cst_48 = arith.constant dense<0.000000e+00> : vector<16x32xf32>
    %126 = tpu.matmul %124, %125, %cst_48 {dimension_numbers = #tpu.dot_dimension_numbers<[1], [0], [0], [1], [0, 0, 1, 1], [], []>} : vector<16x8xf32>, vector<8x32xf32>, vector<16x32xf32> -> vector<16x32xf32>
    %127 = arith.addf %107, %126 : vector<16x32xf32>
    %128 = vector.extract_strided_slice %8 {offsets = [16, 8], sizes = [16, 8], strides = [1, 1]} : vector<32x32xf32> to vector<16x8xf32>
    %129 = vector.extract_strided_slice %9 {offsets = [16, 8], sizes = [16, 8], strides = [1, 1]} : vector<32x32xf32> to vector<16x8xf32>
    %130 = vector.extract_strided_slice %10 {offsets = [16, 8], sizes = [16, 8], strides = [1, 1]} : vector<32x32xf32> to vector<16x8xf32>
    %cst_49 = arith.constant dense<0.000000e+00> : vector<16x16xf32>
    %131 = tpu.matmul %128, %129, %cst_49 {dimension_numbers = #tpu.dot_dimension_numbers<[1], [1], [0], [0], [0, 0, 1, 0], [], []>} : vector<16x8xf32>, vector<16x8xf32>, vector<16x16xf32> -> vector<16x16xf32>
    %132 = arith.addf %131, %18 : vector<16x16xf32>
    %cst_50 = arith.constant dense<0xFF800000> : vector<16xf32>
    %133 = vector.multi_reduction <maximumf>, %132, %cst_50 [1] : vector<16x16xf32> to vector<16xf32>
    %cst_51 = arith.constant 0xFF800000 : f32
    %134 = vector.broadcast %cst_51 : f32 to vector<16xf32>
    %135 = arith.maximumf %134, %133 : vector<16xf32>
    %136 = vector.shape_cast %135 : vector<16xf32> to vector<16x1xf32>
    %137 = vector.broadcast %136 : vector<16x1xf32> to vector<16x16xf32>
    %138 = arith.subf %132, %137 : vector<16x16xf32>
    %139 = math.exp %138 : vector<16x16xf32>
    %cst_52 = arith.constant dense<0.000000e+00> : vector<16xf32>
    %140 = vector.multi_reduction <add>, %139, %cst_52 [1] : vector<16x16xf32> to vector<16xf32>
    %141 = vector.shape_cast %140 : vector<16xf32> to vector<16x1xf32>
    %142 = vector.broadcast %141 : vector<16x1xf32> to vector<16x16xf32>
    %143 = arith.divf %139, %142 : vector<16x16xf32>
    %cst_53 = arith.constant dense<0.000000e+00> : vector<16x8xf32>
    %144 = tpu.matmul %143, %130, %cst_53 {dimension_numbers = #tpu.dot_dimension_numbers<[1], [0], [0], [1], [0, 0, 1, 1], [], []>} : vector<16x16xf32>, vector<16x8xf32>, vector<16x8xf32> -> vector<16x8xf32>
    %145 = vector.extract_strided_slice %19 {offsets = [8, 0], sizes = [8, 32], strides = [1, 1]} : vector<32x32xf32> to vector<8x32xf32>
    %cst_54 = arith.constant dense<0.000000e+00> : vector<16x32xf32>
    %146 = tpu.matmul %144, %145, %cst_54 {dimension_numbers = #tpu.dot_dimension_numbers<[1], [0], [0], [1], [0, 0, 1, 1], [], []>} : vector<16x8xf32>, vector<8x32xf32>, vector<16x32xf32> -> vector<16x32xf32>
    %147 = arith.addf %127, %146 : vector<16x32xf32>
    %148 = vector.extract_strided_slice %8 {offsets = [16, 16], sizes = [16, 8], strides = [1, 1]} : vector<32x32xf32> to vector<16x8xf32>
    %149 = vector.extract_strided_slice %9 {offsets = [16, 16], sizes = [16, 8], strides = [1, 1]} : vector<32x32xf32> to vector<16x8xf32>
    %150 = vector.extract_strided_slice %10 {offsets = [16, 16], sizes = [16, 8], strides = [1, 1]} : vector<32x32xf32> to vector<16x8xf32>
    %cst_55 = arith.constant dense<0.000000e+00> : vector<16x16xf32>
    %151 = tpu.matmul %148, %149, %cst_55 {dimension_numbers = #tpu.dot_dimension_numbers<[1], [1], [0], [0], [0, 0, 1, 0], [], []>} : vector<16x8xf32>, vector<16x8xf32>, vector<16x16xf32> -> vector<16x16xf32>
    %152 = arith.addf %151, %18 : vector<16x16xf32>
    %cst_56 = arith.constant dense<0xFF800000> : vector<16xf32>
    %153 = vector.multi_reduction <maximumf>, %152, %cst_56 [1] : vector<16x16xf32> to vector<16xf32>
    %cst_57 = arith.constant 0xFF800000 : f32
    %154 = vector.broadcast %cst_57 : f32 to vector<16xf32>
    %155 = arith.maximumf %154, %153 : vector<16xf32>
    %156 = vector.shape_cast %155 : vector<16xf32> to vector<16x1xf32>
    %157 = vector.broadcast %156 : vector<16x1xf32> to vector<16x16xf32>
    %158 = arith.subf %152, %157 : vector<16x16xf32>
    %159 = math.exp %158 : vector<16x16xf32>
    %cst_58 = arith.constant dense<0.000000e+00> : vector<16xf32>
    %160 = vector.multi_reduction <add>, %159, %cst_58 [1] : vector<16x16xf32> to vector<16xf32>
    %161 = vector.shape_cast %160 : vector<16xf32> to vector<16x1xf32>
    %162 = vector.broadcast %161 : vector<16x1xf32> to vector<16x16xf32>
    %163 = arith.divf %159, %162 : vector<16x16xf32>
    %cst_59 = arith.constant dense<0.000000e+00> : vector<16x8xf32>
    %164 = tpu.matmul %163, %150, %cst_59 {dimension_numbers = #tpu.dot_dimension_numbers<[1], [0], [0], [1], [0, 0, 1, 1], [], []>} : vector<16x16xf32>, vector<16x8xf32>, vector<16x8xf32> -> vector<16x8xf32>
    %165 = vector.extract_strided_slice %19 {offsets = [16, 0], sizes = [8, 32], strides = [1, 1]} : vector<32x32xf32> to vector<8x32xf32>
    %cst_60 = arith.constant dense<0.000000e+00> : vector<16x32xf32>
    %166 = tpu.matmul %164, %165, %cst_60 {dimension_numbers = #tpu.dot_dimension_numbers<[1], [0], [0], [1], [0, 0, 1, 1], [], []>} : vector<16x8xf32>, vector<8x32xf32>, vector<16x32xf32> -> vector<16x32xf32>
    %167 = arith.addf %147, %166 : vector<16x32xf32>
    %168 = vector.extract_strided_slice %8 {offsets = [16, 24], sizes = [16, 8], strides = [1, 1]} : vector<32x32xf32> to vector<16x8xf32>
    %169 = vector.extract_strided_slice %9 {offsets = [16, 24], sizes = [16, 8], strides = [1, 1]} : vector<32x32xf32> to vector<16x8xf32>
    %170 = vector.extract_strided_slice %10 {offsets = [16, 24], sizes = [16, 8], strides = [1, 1]} : vector<32x32xf32> to vector<16x8xf32>
    %cst_61 = arith.constant dense<0.000000e+00> : vector<16x16xf32>
    %171 = tpu.matmul %168, %169, %cst_61 {dimension_numbers = #tpu.dot_dimension_numbers<[1], [1], [0], [0], [0, 0, 1, 0], [], []>} : vector<16x8xf32>, vector<16x8xf32>, vector<16x16xf32> -> vector<16x16xf32>
    %172 = arith.addf %171, %18 : vector<16x16xf32>
    %cst_62 = arith.constant dense<0xFF800000> : vector<16xf32>
    %173 = vector.multi_reduction <maximumf>, %172, %cst_62 [1] : vector<16x16xf32> to vector<16xf32>
    %cst_63 = arith.constant 0xFF800000 : f32
    %174 = vector.broadcast %cst_63 : f32 to vector<16xf32>
    %175 = arith.maximumf %174, %173 : vector<16xf32>
    %176 = vector.shape_cast %175 : vector<16xf32> to vector<16x1xf32>
    %177 = vector.broadcast %176 : vector<16x1xf32> to vector<16x16xf32>
    %178 = arith.subf %172, %177 : vector<16x16xf32>
    %179 = math.exp %178 : vector<16x16xf32>
    %cst_64 = arith.constant dense<0.000000e+00> : vector<16xf32>
    %180 = vector.multi_reduction <add>, %179, %cst_64 [1] : vector<16x16xf32> to vector<16xf32>
    %181 = vector.shape_cast %180 : vector<16xf32> to vector<16x1xf32>
    %182 = vector.broadcast %181 : vector<16x1xf32> to vector<16x16xf32>
    %183 = arith.divf %179, %182 : vector<16x16xf32>
    %cst_65 = arith.constant dense<0.000000e+00> : vector<16x8xf32>
    %184 = tpu.matmul %183, %170, %cst_65 {dimension_numbers = #tpu.dot_dimension_numbers<[1], [0], [0], [1], [0, 0, 1, 1], [], []>} : vector<16x16xf32>, vector<16x8xf32>, vector<16x8xf32> -> vector<16x8xf32>
    %185 = vector.extract_strided_slice %19 {offsets = [24, 0], sizes = [8, 32], strides = [1, 1]} : vector<32x32xf32> to vector<8x32xf32>
    %cst_66 = arith.constant dense<0.000000e+00> : vector<16x32xf32>
    %186 = tpu.matmul %184, %185, %cst_66 {dimension_numbers = #tpu.dot_dimension_numbers<[1], [0], [0], [1], [0, 0, 1, 1], [], []>} : vector<16x8xf32>, vector<8x32xf32>, vector<16x32xf32> -> vector<16x32xf32>
    %187 = arith.addf %167, %186 : vector<16x32xf32>
    %188 = vector.shape_cast %21 : vector<32xf32> to vector<1x32xf32>
    %189 = vector.broadcast %188 : vector<1x32xf32> to vector<16x32xf32>
    %190 = arith.addf %187, %189 : vector<16x32xf32>
    %c16 = arith.constant 16 : index
    %c0_67 = arith.constant 0 : index
    %191 = vector.load %arg6[%c16, %c0_67] : memref<32x32xf32, #tpu.memory_space<vmem>>, vector<16x32xf32>
    tpu.vector_store %arg6[%c16, %c0_67], %190 {strides = array<i32>} : memref<32x32xf32, #tpu.memory_space<vmem>>, vector<16x32xf32>,
    return
  }
  func.func @transform_0(%arg0: i32) -> (i32, i32) {
    %c0_i32 = arith.constant 0 : i32
    %c0_i32_0 = arith.constant 0 : i32
    %c0_i32_1 = arith.constant 0 : i32
    return %c0_i32, %c0_i32_0 : i32, i32
  }
  func.func @transform_1(%arg0: i32) -> (i32, i32) {
    %c0_i32 = arith.constant 0 : i32
    %c0_i32_0 = arith.constant 0 : i32
    %c0_i32_1 = arith.constant 0 : i32
    return %c0_i32, %c0_i32_0 : i32, i32
  }
  func.func @transform_2(%arg0: i32) -> (i32, i32) {
    %c0_i32 = arith.constant 0 : i32
    %c0_i32_0 = arith.constant 0 : i32
    %c0_i32_1 = arith.constant 0 : i32
    return %c0_i32, %c0_i32_0 : i32, i32
  }
  func.func @transform_3(%arg0: i32) -> (i32, i32) {
    %c0_i32 = arith.constant 0 : i32
    %c0_i32_0 = arith.constant 0 : i32
    %c0_i32_1 = arith.constant 0 : i32
    return %c0_i32, %c0_i32_0 : i32, i32
  }
  func.func @transform_4(%arg0: i32) -> (i32, i32) {
    %c0_i32 = arith.constant 0 : i32
    %c0_i32_0 = arith.constant 0 : i32
    %c0_i32_1 = arith.constant 0 : i32
    return %c0_i32, %c0_i32_0 : i32, i32
  }
  func.func @transform_5(%arg0: i32) -> (i32, i32) {
    %c0_i32 = arith.constant 0 : i32
    %c0_i32_0 = arith.constant 0 : i32
    %c0_i32_1 = arith.constant 0 : i32
    return %c0_i32, %c0_i32_0 : i32, i32
  }
  func.func @transform_6(%arg0: i32) -> (i32, i32) {
    %c0_i32 = arith.constant 0 : i32
    %c0_i32_0 = arith.constant 0 : i32
    %c0_i32_1 = arith.constant 0 : i32
    return %c0_i32, %c0_i32_0 : i32, i32
  }
  func.func @transform_7(%arg0: i32) -> (i32, i32) {
    %c0_i32 = arith.constant 0 : i32
    %c0_i32_0 = arith.constant 0 : i32
    %c0_i32_1 = arith.constant 0 : i32
    return %c0_i32, %c0_i32_0 : i32, i32
  }
}

</mosaic_0001>

<llo_original>
// kernel: tpu_custom_call.1
$region0: #{tpu_custom_call.1}
  #allocation0 [shape = 'u32[]', space=smem, size = 0x4, offset = 0x4, fixed_abs, tag = 'smem constant byte address 0x4 - core index']
  #allocation1 [shape = 'u32[144,128]{1,0:T(1,128)}', space=vmem, size = 0x12000, scoped, tag = 'internal scratch']
  %s0 = inlined_call_operand.hbm [shape: f32[32,32], index: 0, kind: input, shape index: {}]
  %s1 = inlined_call_operand.hbm [shape: f32[32,96], index: 1, kind: input, shape index: {}]
  %s2 = inlined_call_operand.vmem [shape: f32[1,96], index: 2, kind: input, shape index: {}]
  %s3 = inlined_call_operand.hbm [shape: f32[32,32], index: 3, kind: input, shape index: {}]
  %s4 = inlined_call_operand.vmem [shape: f32[1,32], index: 4, kind: input, shape index: {}]
  %s5 = inlined_call_operand.hbm [shape: f32[32,32], index: 5, kind: output, shape index: {0}]
  %s6 = inlined_call_operand.hbm [shape: f32[32,32], index: 6, kind: output, shape index: {1}]
  %s7 = inlined_call_operand.hbm [shape: f32[32,32], index: 7, kind: output, shape index: {2}]
  %8 = xla_tuple %s5, %s6, %s7
  %s9 = sld [smem:[#allocation0]]
  $region58: #{tpu_custom_call.1} parent=0
    _
  %s11 = ssub.s32 1, %s9
  %s12 = scalar_select 0, %s11, %s9
  $region1: #{tpu_custom_call.1} parent=0
    #allocation2 [shape = 'u8[16384]{0}', space=vmem, size = 0x4000, scoped, tag = 'input window, operand 0, single buffered']
    #allocation3 [shape = 's32[1]{0}', space=sflag, size = 0x4, scoped, tag = 'scoped memory for tpu_custom_call.1']
    #allocation4 [shape = 's32[1]{0}', space=sflag, size = 0x4, scoped, tag = 'scoped memory for tpu_custom_call.1']
    #allocation5 [shape = 'u8[16384]{0}', space=vmem, size = 0x4000, scoped, tag = 'input window, operand 1, single buffered']
    #allocation6 [shape = 's32[1]{0}', space=sflag, size = 0x4, scoped, tag = 'scoped memory for tpu_custom_call.1']
    #allocation7 [shape = 'u8[16384]{0}', space=vmem, size = 0x4000, scoped, tag = 'input window, operand 3, single buffered']
    #allocation8 [shape = 'u8[16384]{0}', space=vmem, size = 0x4000, scoped, tag = 'output window, operand 0, single buffered']
    #allocation9 [shape = 'u8[16384]{0}', space=vmem, size = 0x4000, scoped, tag = 'output window, operand 1, single buffered']
    #allocation10 [shape = 's32[1]{0}', space=sflag, size = 0x4, scoped, tag = 'scoped memory for tpu_custom_call.1']
    #allocation11 [shape = 'u8[16384]{0}', space=vmem, size = 0x4000, scoped, tag = 'output window, operand 2, single buffered']
    %13 = vsyncpa [#allocation3], 0
    %14 = vsyncpa [#allocation6], 0
    %15 = vsyncpa [#allocation4], 0
    %16 = vsyncpa [#allocation10], 0
    // Predicated region
    $region2: #{tpu_custom_call.1} parent=1 // pred_check
      _
    $region3: #{tpu_custom_call.1} parent=1 // pred_check_branch
      %18 = sbr.rel (0) target = $region5
    $region4: #{tpu_custom_call.1} parent=1 // pred_region
      %s20 = ssub.s32 512, 512
      %21 = vsyncadd [#allocation3], %s20
      %s22 = sshll.u32 [#allocation2], 4
      %s23 = int_to_ptr.vmem [resolvable:$true] %s22
      %28 = dma.hbm_to_vmem [thread:$0]  %s0, 512, %s23, [#allocation3], 128, 128, 8
    $region5: #{tpu_custom_call.1} parent=1 // pred_fallthru
      _
    // Predicated region
    $region6: #{tpu_custom_call.1} parent=1 // pred_check
      _
    $region7: #{tpu_custom_call.1} parent=1 // pred_check_branch
      %30 = sbr.rel (0) target = $region9
    $region8: #{tpu_custom_call.1} parent=1 // pred_region
      %s32 = ssub.s32 512, 512
      %33 = vsyncadd [#allocation6], %s32
      %s34 = sshll.u32 [#allocation5], 4
      %s35 = int_to_ptr.vmem [resolvable:$true] %s34
      %40 = dma.hbm_to_vmem [thread:$0]  %s1, 512, %s35, [#allocation6], 128, 128, 8
    $region9: #{tpu_custom_call.1} parent=1 // pred_fallthru
      _
    // Predicated region
    $region10: #{tpu_custom_call.1} parent=1 // pred_check
      _
    $region11: #{tpu_custom_call.1} parent=1 // pred_check_branch
      %42 = sbr.rel (0) target = $region13
    $region12: #{tpu_custom_call.1} parent=1 // pred_region
      _
    $region13: #{tpu_custom_call.1} parent=1 // pred_fallthru
      _
    // Predicated region
    $region14: #{tpu_custom_call.1} parent=1 // pred_check
      _
    $region15: #{tpu_custom_call.1} parent=1 // pred_check_branch
      %44 = sbr.rel (0) target = $region17
    $region16: #{tpu_custom_call.1} parent=1 // pred_region
      %s46 = ssub.s32 512, 512
      %47 = vsyncadd [#allocation6], %s46
      %s48 = sshll.u32 [#allocation7], 4
      %s49 = int_to_ptr.vmem [resolvable:$true] %s48
      %54 = dma.hbm_to_vmem [thread:$0]  %s3, 512, %s49, [#allocation6], 128, 128, 8
    $region17: #{tpu_custom_call.1} parent=1 // pred_fallthru
      _
    // Predicated region
    $region18: #{tpu_custom_call.1} parent=1 // pred_check
      _
    $region19: #{tpu_custom_call.1} parent=1 // pred_check_branch
      %56 = sbr.rel (0) target = $region21
    $region20: #{tpu_custom_call.1} parent=1 // pred_region
      _
    $region21: #{tpu_custom_call.1} parent=1 // pred_fallthru
      _
    // Predicated region
    $region22: #{tpu_custom_call.1} parent=1 // pred_check
      _
    $region23: #{tpu_custom_call.1} parent=1 // pred_check_branch
      %58 = sbr.rel (0) target = $region25
    $region24: #{tpu_custom_call.1} parent=1 // pred_region
      %59 = dma.done [#allocation3], 512
    $region25: #{tpu_custom_call.1} parent=1 // pred_fallthru
      _
    // Predicated region
    $region26: #{tpu_custom_call.1} parent=1 // pred_check
      _
    $region27: #{tpu_custom_call.1} parent=1 // pred_check_branch
      %61 = sbr.rel (0) target = $region29
    $region28: #{tpu_custom_call.1} parent=1 // pred_region
      %62 = dma.done [#allocation6], 512
    $region29: #{tpu_custom_call.1} parent=1 // pred_fallthru
      _
    // Predicated region
    $region30: #{tpu_custom_call.1} parent=1 // pred_check
      _
    $region31: #{tpu_custom_call.1} parent=1 // pred_check_branch
      %64 = sbr.rel (0) target = $region33
    $region32: #{tpu_custom_call.1} parent=1 // pred_region
      %65 = dma.done [#allocation6], 512
    $region33: #{tpu_custom_call.1} parent=1 // pred_fallthru
      _
    %v66 = vld [vmem:[#allocation2] sm:$0xff]
    %v67 = vld [vmem:[#allocation2 + $0x8] sm:$0xff]
    %v68 = vld [vmem:[#allocation2 + $0x10] sm:$0xff]
    %v69 = vld [vmem:[#allocation2 + $0x18] sm:$0xff]
    %v70 = vld [vmem:[#allocation5] sm:$0xff]
    %v71 = vld [vmem:[#allocation5 + $0x8] sm:$0xff]
    %v72 = vld [vmem:[#allocation5 + $0x10] sm:$0xff]
    %v73 = vld [vmem:[#allocation5 + $0x18] sm:$0xff]
    %v74 = vld [vmem:[%s2] sm:$0x1]
    %v76 = vlaneseq
    %v77 = vshrl.u32 %v76, 7
    %v78 = vsub.s32 0, %v77
    %v79 = vrot.slane %v74, %v78
    %vm81 = vcmask 261120
    %v83 = vsel %vm81, %v66, 0
    %v86 = vsel %vm81, %v67, 0
    %v89 = vsel %vm81, %v68, 0
    %v92 = vsel %vm81, %v69, 0
    %94 = vmatprep.subr.mxu0 0.0
    %95 = vmatpush1.msra.mxu0 %v70
    %96 = vmatprep.subr.mxu0 0.0
    %97 = vmatpush1.msra.mxu0 %v71
    %98 = vmatprep.subr.mxu0 0.0
    %99 = vmatpush1.msra.mxu0 %v72
    %100 = vmatprep.subr.mxu0 0.0
    %101 = vmatpush1.msra.mxu0 %v73
    %102 = vmatprep.subr.mxu0 0.0
    %103 = vmatpush1.msra.mxu0 0.0
    %104 = vmatprep.subr.mxu0 0.0
    %105 = vmatpush1.msra.mxu0 0.0
    %106 = vmatprep.subr.mxu0 0.0
    %107 = vmatpush1.msra.mxu0 0.0
    %108 = vmatprep.subr.mxu0 0.0
    %109 = vmatpush1.msra.mxu0 0.0
    %110 = vmatprep.subr.mxu0 0.0
    %111 = vmatpush1.msra.mxu0 0.0
    %112 = vmatprep.subr.mxu0 0.0
    %113 = vmatpush1.msra.mxu0 0.0
    %114 = vmatprep.subr.mxu0 0.0
    %115 = vmatpush1.msra.mxu0 0.0
    %116 = vmatprep.subr.mxu0 0.0
    %117 = vmatpush1.msra.mxu0 0.0
    %118 = vmatprep.subr.mxu0 0.0
    %119 = vmatpush1.msra.mxu0 0.0
    %120 = vmatprep.subr.mxu0 0.0
    %121 = vmatpush1.msra.mxu0 0.0
    %122 = vmatprep.subr.mxu0 0.0
    %123 = vmatpush1.msra.mxu0 0.0
    %124 = vmatprep.subr.mxu0 0.0
    %125 = vmatpush1.msra.mxu0 0.0
    %126 = vmatprep.subr.mxu0 0.0
    %127 = vmatpush1.msra.mxu0 0.0
    %128 = vmatprep.subr.mxu0 0.0
    %129 = vmatpush1.msra.mxu0 0.0
    %130 = vmatprep.subr.mxu0 0.0
    %131 = vmatpush1.msra.mxu0 0.0
    %132 = vmatprep.subr.mxu0 0.0
    %133 = vmatpush1.msra.mxu0 0.0
    %134 = vmatprep.subr.mxu0 0.0
    %135 = vmatpush1.msra.mxu0 0.0
    %136 = vmatprep.subr.mxu0 0.0
    %137 = vmatpush1.msra.mxu0 0.0
    %138 = vmatprep.subr.mxu0 0.0
    %139 = vmatpush1.msra.mxu0 0.0
    %140 = vmatprep.subr.mxu0 0.0
    %141 = vmatpush1.msra.mxu0 0.0
    %142 = vmatprep.subr.mxu0 0.0
    %143 = vmatpush1.msra.mxu0 0.0
    %144 = vmatprep.subr.mxu0 0.0
    %145 = vmatpush1.msra.mxu0 0.0
    %146 = vmatprep.subr.mxu0 0.0
    %147 = vmatpush1.msra.mxu0 0.0
    %148 = vmatprep.subr.mxu0 0.0
    %149 = vmatpush1.msra.mxu0 0.0
    %150 = vmatprep.subr.mxu0 0.0
    %151 = vmatpush1.msra.mxu0 0.0
    %152 = vmatprep.subr.mxu0 0.0
    %153 = vmatpush1.msra.mxu0 0.0
    %154 = vmatprep.subr.mxu0 0.0
    %155 = vmatpush1.msra.mxu0 0.0
    %156 = vmatprep.subr.mxu0 0.0
    %157 = vmatpush1.msra.mxu0 0.0
    %158 = vmatprep.mubr.f32.mxu0 0.0
    %159 = vmatmul.mubr.f32.gmra.mrb[0].mxu0 %v83
    %v160 = vpop.f32.mrb[0].mxu0
    %v161 = vadd.f32 %v79, %v160
    %v162 = vpop.f32.mrb[0].mxu0
    %163 = vmatprep.mubr.f32.mxu0 0.0
    %164 = vmatmul.mubr.f32.gmra.mrb[0].mxu0 %v86
    %v165 = vpop.f32.mrb[0].mxu0
    %v166 = vadd.f32 %v79, %v165
    %v167 = vpop.f32.mrb[0].mxu0
    %168 = vmatprep.mubr.f32.mxu0 0.0
    %169 = vmatmul.mubr.f32.gmra.mrb[0].mxu0 %v89
    %v170 = vpop.f32.mrb[0].mxu0
    %v171 = vadd.f32 %v79, %v170
    %v172 = vpop.f32.mrb[0].mxu0
    %173 = vmatprep.mubr.f32.mxu0 0.0
    %174 = vmatmul.mubr.f32.gmra.mrb[0].mxu0 %v92
    %v175 = vpop.f32.mrb[0].mxu0
    %v176 = vadd.f32 %v79, %v175
    %v177 = vpop.f32.mrb[0].mxu0
    %178 = vdwg.mxu0
    %183 = vrot.lane.b32.xlu0 %v161, 96
    %v184 = vpop.permute.xlu0 %183
    %185 = vrot.lane.b32.xlu0 %v166, 96
    %v186 = vpop.permute.xlu0 %185
    %187 = vrot.lane.b32.xlu0 %v171, 96
    %v188 = vpop.permute.xlu0 %187
    %189 = vrot.lane.b32.xlu0 %v176, 96
    %v190 = vpop.permute.xlu0 %189
    %195 = vst.msk [vmem:[#allocation9] sm:$0xff] %vm81, %v184
    %196 = vst.msk [vmem:[#allocation9 + $0x8] sm:$0xff] %vm81, %v186
    %197 = vst.msk [vmem:[#allocation9 + $0x10] sm:$0xff] %vm81, %v188
    %198 = vst.msk [vmem:[#allocation9 + $0x18] sm:$0xff] %vm81, %v190
    %199 = vrot.lane.b32.xlu0 %v161, 64
    %v200 = vpop.permute.xlu0 %199
    %201 = vrot.lane.b32.xlu0 %v166, 64
    %v202 = vpop.permute.xlu0 %201
    %203 = vrot.lane.b32.xlu0 %v171, 64
    %v204 = vpop.permute.xlu0 %203
    %205 = vrot.lane.b32.xlu0 %v176, 64
    %v206 = vpop.permute.xlu0 %205
    %211 = vst.msk [vmem:[#allocation11] sm:$0xff] %vm81, %v200
    %212 = vst.msk [vmem:[#allocation11 + $0x8] sm:$0xff] %vm81, %v202
    %213 = vst.msk [vmem:[#allocation11 + $0x10] sm:$0xff] %vm81, %v204
    %214 = vst.msk [vmem:[#allocation11 + $0x18] sm:$0xff] %vm81, %v206
    %v215 = vlaneseq
    %v216 = vshrl.u32 %v215, 7
    %v217 = vadd.s32 %v216, 8
    %v218 = vlaneseq
    %v219 = vand.u32 %v218, 127
    %vm220 = vcmp.le.s32.totalorder %v219, %v216
    %vm221 = vcmp.le.s32.totalorder %v219, %v217
    %v222 = vsel %vm220, 0.0, -1e+30
    %v223 = vsel %vm221, 0.0, -1e+30
    %v224 = vld [vmem:[#allocation7] sm:$0xff]
    %v225 = vld [vmem:[#allocation7 + $0x8] sm:$0xff]
    %v226 = vld [vmem:[#allocation7 + $0x10] sm:$0xff]
    %v227 = vld [vmem:[#allocation7 + $0x18] sm:$0xff]
    %v228 = vld [vmem:[%s4] sm:$0x1]
    %vm229 = vcmask 64512
    %v230 = vsel %vm229, %v161, 0
    %v232 = vsel %vm229, %v166, 0
    %v234 = vsel %vm229, %v184, 0
    %v236 = vsel %vm229, %v186, 0
    %238 = vmatprep.subr.mxu0 0.0
    %239 = vmatpush1.xpose.msra.mxu0 %v234
    %240 = vmatprep.subr.mxu0 0.0
    %241 = vmatpush1.xpose.msra.mxu0 %v236
    %242 = vmatprep.subr.mxu0 0.0
    %243 = vmatpush1.xpose.msra.mxu0 0.0
    %244 = vmatprep.subr.mxu0 0.0
    %245 = vmatpush1.xpose.msra.mxu0 0.0
    %246 = vmatprep.subr.mxu0 0.0
    %247 = vmatpush1.xpose.msra.mxu0 0.0
    %248 = vmatprep.subr.mxu0 0.0
    %249 = vmatpush1.xpose.msra.mxu0 0.0
    %250 = vmatprep.subr.mxu0 0.0
    %251 = vmatpush1.xpose.msra.mxu0 0.0
    %252 = vmatprep.subr.mxu0 0.0
    %253 = vmatpush1.xpose.msra.mxu0 0.0
    %254 = vmatprep.subr.mxu0 0.0
    %255 = vmatpush1.xpose.msra.mxu0 0.0
    %256 = vmatprep.subr.mxu0 0.0
    %257 = vmatpush1.xpose.msra.mxu0 0.0
    %258 = vmatprep.subr.mxu0 0.0
    %259 = vmatpush1.xpose.msra.mxu0 0.0
    %260 = vmatprep.subr.mxu0 0.0
    %261 = vmatpush1.xpose.msra.mxu0 0.0
    %262 = vmatprep.subr.mxu0 0.0
    %263 = vmatpush1.xpose.msra.mxu0 0.0
    %264 = vmatprep.subr.mxu0 0.0
    %265 = vmatpush1.xpose.msra.mxu0 0.0
    %266 = vmatprep.subr.mxu0 0.0
    %267 = vmatpush1.xpose.msra.mxu0 0.0
    %268 = vmatprep.subr.mxu0 0.0
    %269 = vmatpush1.xpose.msra.mxu0 0.0
    %270 = vmatprep.subr.mxu0 0.0
    %271 = vmatpush1.xpose.msra.mxu0 0.0
    %272 = vmatprep.subr.mxu0 0.0
    %273 = vmatpush1.xpose.msra.mxu0 0.0
    %274 = vmatprep.subr.mxu0 0.0
    %275 = vmatpush1.xpose.msra.mxu0 0.0
    %276 = vmatprep.subr.mxu0 0.0
    %277 = vmatpush1.xpose.msra.mxu0 0.0
    %278 = vmatprep.subr.mxu0 0.0
    %279 = vmatpush1.xpose.msra.mxu0 0.0
    %280 = vmatprep.subr.mxu0 0.0
    %281 = vmatpush1.xpose.msra.mxu0 0.0
    %282 = vmatprep.subr.mxu0 0.0
    %283 = vmatpush1.xpose.msra.mxu0 0.0
    %284 = vmatprep.subr.mxu0 0.0
    %285 = vmatpush1.xpose.msra.mxu0 0.0
    %286 = vmatprep.subr.mxu0 0.0
    %287 = vmatpush1.xpose.msra.mxu0 0.0
    %288 = vmatprep.subr.mxu0 0.0
    %289 = vmatpush1.xpose.msra.mxu0 0.0
    %290 = vmatprep.subr.mxu0 0.0
    %291 = vmatpush1.xpose.msra.mxu0 0.0
    %292 = vmatprep.subr.mxu0 0.0
    %293 = vmatpush1.xpose.msra.mxu0 0.0
    %294 = vmatprep.subr.mxu0 0.0
    %295 = vmatpush1.xpose.msra.mxu0 0.0
    %296 = vmatprep.subr.mxu0 0.0
    %297 = vmatpush1.xpose.msra.mxu0 0.0
    %298 = vmatprep.subr.mxu0 0.0
    %299 = vmatpush1.xpose.msra.mxu0 0.0
    %300 = vmatprep.subr.mxu0 0.0
    %301 = vmatpush1.xpose.msra.mxu0 0.0
    %302 = vmatprep.mubr.f32.mxu0 0.0
    %303 = vmatmul.mubr.f32.gmra.mrb[0].mxu0 %v230
    %v304 = vpop.f32.mrb[0].mxu0
    %v305 = vadd.f32 %v222, %v304
    %v306 = vpop.f32.mrb[0].mxu0
    %307 = vmatprep.mubr.f32.mxu0 0.0
    %308 = vmatmul.mubr.f32.gmra.mrb[0].mxu0 %v232
    %v309 = vpop.f32.mrb[0].mxu0
    %v310 = vadd.f32 %v223, %v309
    %v311 = vpop.f32.mrb[0].mxu0
    %312 = vdwg.mxu0
    %vm313 = vcmask 130048
    %v314 = vsel %vm313, %v305, -inf
    %315 = vmax.xlane.f32.xlu0 %v314
    %v316 = vpop.xlane.xlu0 %315
    %v317 = vsel %vm313, %v310, -inf
    %318 = vmax.xlane.f32.xlu0 %v317
    %v319 = vpop.xlane.xlu0 %318
    %v320 = vsub.f32 %v305, %v316
    %v321 = vsub.f32 %v310, %v319
    %v322 = vmul.f32 %v320, 1.442695
    %v323 = vpow.pop %v322
    %v324 = vmul.f32 %v321, 1.442695
    %v325 = vpow.pop %v324
    %v326 = vsel %vm313, %v323, 0.0
    %327 = vadd.xlane.f32.xlu0 %v326
    %v328 = vpop.xlane.xlu0 %327
    %v329 = vsel %vm313, %v325, 0.0
    %330 = vadd.xlane.f32.xlu0 %v329
    %v331 = vpop.xlane.xlu0 %330
    %v332 = vrcp.pop %v328
    %v333 = vmul.f32 %v323, %v332
    %v334 = vrcp.pop %v331
    %v335 = vmul.f32 %v325, %v334
    %v337 = vsel %vm313, %v333, 0
    %v340 = vsel %vm313, %v335, 0
    %342 = vmatprep.subr.mxu0 0.0
    %343 = vmatpush1.msra.mxu0 %v200
    %344 = vmatprep.subr.mxu0 0.0
    %345 = vmatpush1.msra.mxu0 %v202
    %346 = vmatprep.subr.mxu0 0.0
    %347 = vmatpush1.msra.mxu0 0.0
    %348 = vmatprep.subr.mxu0 0.0
    %349 = vmatpush1.msra.mxu0 0.0
    %350 = vmatprep.subr.mxu0 0.0
    %351 = vmatpush1.msra.mxu0 0.0
    %352 = vmatprep.subr.mxu0 0.0
    %353 = vmatpush1.msra.mxu0 0.0
    %354 = vmatprep.subr.mxu0 0.0
    %355 = vmatpush1.msra.mxu0 0.0
    %356 = vmatprep.subr.mxu0 0.0
    %357 = vmatpush1.msra.mxu0 0.0
    %358 = vmatprep.subr.mxu0 0.0
    %359 = vmatpush1.msra.mxu0 0.0
    %360 = vmatprep.subr.mxu0 0.0
    %361 = vmatpush1.msra.mxu0 0.0
    %362 = vmatprep.subr.mxu0 0.0
    %363 = vmatpush1.msra.mxu0 0.0
    %364 = vmatprep.subr.mxu0 0.0
    %365 = vmatpush1.msra.mxu0 0.0
    %366 = vmatprep.subr.mxu0 0.0
    %367 = vmatpush1.msra.mxu0 0.0
    %368 = vmatprep.subr.mxu0 0.0
    %369 = vmatpush1.msra.mxu0 0.0
    %370 = vmatprep.subr.mxu0 0.0
    %371 = vmatpush1.msra.mxu0 0.0
    %372 = vmatprep.subr.mxu0 0.0
    %373 = vmatpush1.msra.mxu0 0.0
    %374 = vmatprep.subr.mxu0 0.0
    %375 = vmatpush1.msra.mxu0 0.0
    %376 = vmatprep.subr.mxu0 0.0
    %377 = vmatpush1.msra.mxu0 0.0
    %378 = vmatprep.subr.mxu0 0.0
    %379 = vmatpush1.msra.mxu0 0.0
    %380 = vmatprep.subr.mxu0 0.0
    %381 = vmatpush1.msra.mxu0 0.0
    %382 = vmatprep.subr.mxu0 0.0
    %383 = vmatpush1.msra.mxu0 0.0
    %384 = vmatprep.subr.mxu0 0.0
    %385 = vmatpush1.msra.mxu0 0.0
    %386 = vmatprep.subr.mxu0 0.0
    %387 = vmatpush1.msra.mxu0 0.0
    %388 = vmatprep.subr.mxu0 0.0
    %389 = vmatpush1.msra.mxu0 0.0
    %390 = vmatprep.subr.mxu0 0.0
    %391 = vmatpush1.msra.mxu0 0.0
    %392 = vmatprep.subr.mxu0 0.0
    %393 = vmatpush1.msra.mxu0 0.0
    %394 = vmatprep.subr.mxu0 0.0
    %395 = vmatpush1.msra.mxu0 0.0
    %396 = vmatprep.subr.mxu0 0.0
    %397 = vmatpush1.msra.mxu0 0.0
    %398 = vmatprep.subr.mxu0 0.0
    %399 = vmatpush1.msra.mxu0 0.0
    %400 = vmatprep.subr.mxu0 0.0
    %401 = vmatpush1.msra.mxu0 0.0
    %402 = vmatprep.subr.mxu0 0.0
    %403 = vmatpush1.msra.mxu0 0.0
    %404 = vmatprep.subr.mxu0 0.0
    %405 = vmatpush1.msra.mxu0 0.0
    %406 = vmatprep.mubr.f32.mxu0 0.0
    %407 = vmatmul.mubr.f32.gmra.mrb[0].mxu0 %v337
    %v408 = vpop.f32.mrb[0].mxu0
    %v409 = vadd.f32 0.0, %v408
    %v410 = vpop.f32.mrb[0].mxu0
    %411 = vmatprep.mubr.f32.mxu0 0.0
    %412 = vmatmul.mubr.f32.gmra.mrb[0].mxu0 %v340
    %v413 = vpop.f32.mrb[0].mxu0
    %v414 = vadd.f32 0.0, %v413
    %v415 = vpop.f32.mrb[0].mxu0
    %416 = vdwg.mxu0
    %417 = vrot.lane.b32.xlu0 %v161, 120
    %v418 = vpop.permute.xlu0 %417
    %419 = vrot.lane.b32.xlu0 %v166, 120
    %v420 = vpop.permute.xlu0 %419
    %421 = vrot.lane.b32.xlu0 %v161, 88
    %v422 = vpop.permute.xlu0 %421
    %423 = vrot.lane.b32.xlu0 %v166, 88
    %v424 = vpop.permute.xlu0 %423
    %v425 = vsel %vm229, %v418, 0
    %v427 = vsel %vm229, %v420, 0
    %v429 = vsel %vm229, %v422, 0
    %v431 = vsel %vm229, %v424, 0
    %433 = vmatprep.subr.mxu0 0.0
    %434 = vmatpush1.xpose.msra.mxu0 %v429
    %435 = vmatprep.subr.mxu0 0.0
    %436 = vmatpush1.xpose.msra.mxu0 %v431
    %437 = vmatprep.subr.mxu0 0.0
    %438 = vmatpush1.xpose.msra.mxu0 0.0
    %439 = vmatprep.subr.mxu0 0.0
    %440 = vmatpush1.xpose.msra.mxu0 0.0
    %441 = vmatprep.subr.mxu0 0.0
    %442 = vmatpush1.xpose.msra.mxu0 0.0
    %443 = vmatprep.subr.mxu0 0.0
    %444 = vmatpush1.xpose.msra.mxu0 0.0
    %445 = vmatprep.subr.mxu0 0.0
    %446 = vmatpush1.xpose.msra.mxu0 0.0
    %447 = vmatprep.subr.mxu0 0.0
    %448 = vmatpush1.xpose.msra.mxu0 0.0
    %449 = vmatprep.subr.mxu0 0.0
    %450 = vmatpush1.xpose.msra.mxu0 0.0
    %451 = vmatprep.subr.mxu0 0.0
    %452 = vmatpush1.xpose.msra.mxu0 0.0
    %453 = vmatprep.subr.mxu0 0.0
    %454 = vmatpush1.xpose.msra.mxu0 0.0
    %455 = vmatprep.subr.mxu0 0.0
    %456 = vmatpush1.xpose.msra.mxu0 0.0
    %457 = vmatprep.subr.mxu0 0.0
    %458 = vmatpush1.xpose.msra.mxu0 0.0
    %459 = vmatprep.subr.mxu0 0.0
    %460 = vmatpush1.xpose.msra.mxu0 0.0
    %461 = vmatprep.subr.mxu0 0.0
    %462 = vmatpush1.xpose.msra.mxu0 0.0
    %463 = vmatprep.subr.mxu0 0.0
    %464 = vmatpush1.xpose.msra.mxu0 0.0
    %465 = vmatprep.subr.mxu0 0.0
    %466 = vmatpush1.xpose.msra.mxu0 0.0
    %467 = vmatprep.subr.mxu0 0.0
    %468 = vmatpush1.xpose.msra.mxu0 0.0
    %469 = vmatprep.subr.mxu0 0.0
    %470 = vmatpush1.xpose.msra.mxu0 0.0
    %471 = vmatprep.subr.mxu0 0.0
    %472 = vmatpush1.xpose.msra.mxu0 0.0
    %473 = vmatprep.subr.mxu0 0.0
    %474 = vmatpush1.xpose.msra.mxu0 0.0
    %475 = vmatprep.subr.mxu0 0.0
    %476 = vmatpush1.xpose.msra.mxu0 0.0
    %477 = vmatprep.subr.mxu0 0.0
    %478 = vmatpush1.xpose.msra.mxu0 0.0
    %479 = vmatprep.subr.mxu0 0.0
    %480 = vmatpush1.xpose.msra.mxu0 0.0
    %481 = vmatprep.subr.mxu0 0.0
    %482 = vmatpush1.xpose.msra.mxu0 0.0
    %483 = vmatprep.subr.mxu0 0.0
    %484 = vmatpush1.xpose.msra.mxu0 0.0
    %485 = vmatprep.subr.mxu0 0.0
    %486 = vmatpush1.xpose.msra.mxu0 0.0
    %487 = vmatprep.subr.mxu0 0.0
    %488 = vmatpush1.xpose.msra.mxu0 0.0
    %489 = vmatprep.subr.mxu0 0.0
    %490 = vmatpush1.xpose.msra.mxu0 0.0
    %491 = vmatprep.subr.mxu0 0.0
    %492 = vmatpush1.xpose.msra.mxu0 0.0
    %493 = vmatprep.subr.mxu0 0.0
    %494 = vmatpush1.xpose.msra.mxu0 0.0
    %495 = vmatprep.subr.mxu0 0.0
    %496 = vmatpush1.xpose.msra.mxu0 0.0
    %497 = vmatprep.mubr.f32.mxu0 0.0
    %498 = vmatmul.mubr.f32.gmra.mrb[0].mxu0 %v425
    %v499 = vpop.f32.mrb[0].mxu0
    %v500 = vadd.f32 %v222, %v499
    %v501 = vpop.f32.mrb[0].mxu0
    %502 = vmatprep.mubr.f32.mxu0 0.0
    %503 = vmatmul.mubr.f32.gmra.mrb[0].mxu0 %v427
    %v504 = vpop.f32.mrb[0].mxu0
    %v505 = vadd.f32 %v223, %v504
    %v506 = vpop.f32.mrb[0].mxu0
    %507 = vdwg.mxu0
    %v508 = vsel %vm313, %v500, -inf
    %509 = vmax.xlane.f32.xlu0 %v508
    %v510 = vpop.xlane.xlu0 %509
    %v511 = vsel %vm313, %v505, -inf
    %512 = vmax.xlane.f32.xlu0 %v511
    %v513 = vpop.xlane.xlu0 %512
    %v514 = vsub.f32 %v500, %v510
    %v515 = vsub.f32 %v505, %v513
    %v516 = vmul.f32 %v514, 1.442695
    %v517 = vpow.pop %v516
    %v518 = vmul.f32 %v515, 1.442695
    %v519 = vpow.pop %v518
    %v520 = vsel %vm313, %v517, 0.0
    %521 = vadd.xlane.f32.xlu0 %v520
    %v522 = vpop.xlane.xlu0 %521
    %v523 = vsel %vm313, %v519, 0.0
    %524 = vadd.xlane.f32.xlu0 %v523
    %v525 = vpop.xlane.xlu0 %524
    %v526 = vrcp.pop %v522
    %v527 = vmul.f32 %v517, %v526
    %v528 = vrcp.pop %v525
    %v529 = vmul.f32 %v519, %v528
    %530 = vrot.lane.b32.xlu0 %v161, 56
    %v531 = vpop.permute.xlu0 %530
    %532 = vrot.lane.b32.xlu0 %v166, 56
    %v533 = vpop.permute.xlu0 %532
    %v537 = vsel %vm313, %v527, 0
    %v540 = vsel %vm313, %v529, 0
    %542 = vmatprep.subr.mxu0 0.0
    %543 = vmatpush1.msra.mxu0 %v531
    %544 = vmatprep.subr.mxu0 0.0
    %545 = vmatpush1.msra.mxu0 %v533
    %546 = vmatprep.subr.mxu0 0.0
    %547 = vmatpush1.msra.mxu0 0.0
    %548 = vmatprep.subr.mxu0 0.0
    %549 = vmatpush1.msra.mxu0 0.0
    %550 = vmatprep.subr.mxu0 0.0
    %551 = vmatpush1.msra.mxu0 0.0
    %552 = vmatprep.subr.mxu0 0.0
    %553 = vmatpush1.msra.mxu0 0.0
    %554 = vmatprep.subr.mxu0 0.0
    %555 = vmatpush1.msra.mxu0 0.0
    %556 = vmatprep.subr.mxu0 0.0
    %557 = vmatpush1.msra.mxu0 0.0
    %558 = vmatprep.subr.mxu0 0.0
    %559 = vmatpush1.msra.mxu0 0.0
    %560 = vmatprep.subr.mxu0 0.0
    %561 = vmatpush1.msra.mxu0 0.0
    %562 = vmatprep.subr.mxu0 0.0
    %563 = vmatpush1.msra.mxu0 0.0
    %564 = vmatprep.subr.mxu0 0.0
    %565 = vmatpush1.msra.mxu0 0.0
    %566 = vmatprep.subr.mxu0 0.0
    %567 = vmatpush1.msra.mxu0 0.0
    %568 = vmatprep.subr.mxu0 0.0
    %569 = vmatpush1.msra.mxu0 0.0
    %570 = vmatprep.subr.mxu0 0.0
    %571 = vmatpush1.msra.mxu0 0.0
    %572 = vmatprep.subr.mxu0 0.0
    %573 = vmatpush1.msra.mxu0 0.0
    %574 = vmatprep.subr.mxu0 0.0
    %575 = vmatpush1.msra.mxu0 0.0
    %576 = vmatprep.subr.mxu0 0.0
    %577 = vmatpush1.msra.mxu0 0.0
    %578 = vmatprep.subr.mxu0 0.0
    %579 = vmatpush1.msra.mxu0 0.0
    %580 = vmatprep.subr.mxu0 0.0
    %581 = vmatpush1.msra.mxu0 0.0
    %582 = vmatprep.subr.mxu0 0.0
    %583 = vmatpush1.msra.mxu0 0.0
    %584 = vmatprep.subr.mxu0 0.0
    %585 = vmatpush1.msra.mxu0 0.0
    %586 = vmatprep.subr.mxu0 0.0
    %587 = vmatpush1.msra.mxu0 0.0
    %588 = vmatprep.subr.mxu0 0.0
    %589 = vmatpush1.msra.mxu0 0.0
    %590 = vmatprep.subr.mxu0 0.0
    %591 = vmatpush1.msra.mxu0 0.0
    %592 = vmatprep.subr.mxu0 0.0
    %593 = vmatpush1.msra.mxu0 0.0
    %594 = vmatprep.subr.mxu0 0.0
    %595 = vmatpush1.msra.mxu0 0.0
    %596 = vmatprep.subr.mxu0 0.0
    %597 = vmatpush1.msra.mxu0 0.0
    %598 = vmatprep.subr.mxu0 0.0
    %599 = vmatpush1.msra.mxu0 0.0
    %600 = vmatprep.subr.mxu0 0.0
    %601 = vmatpush1.msra.mxu0 0.0
    %602 = vmatprep.subr.mxu0 0.0
    %603 = vmatpush1.msra.mxu0 0.0
    %604 = vmatprep.subr.mxu0 0.0
    %605 = vmatpush1.msra.mxu0 0.0
    %606 = vmatprep.mubr.f32.mxu0 0.0
    %607 = vmatmul.mubr.f32.gmra.mrb[0].mxu0 %v537
    %v608 = vpop.f32.mrb[0].mxu0
    %v609 = vadd.f32 0.0, %v608
    %v610 = vpop.f32.mrb[0].mxu0
    %611 = vmatprep.mubr.f32.mxu0 0.0
    %612 = vmatmul.mubr.f32.gmra.mrb[0].mxu0 %v540
    %v613 = vpop.f32.mrb[0].mxu0
    %v614 = vadd.f32 0.0, %v613
    %v615 = vpop.f32.mrb[0].mxu0
    %616 = vdwg.mxu0
    %v618 = vsel %vm229, %v609, 0
    %v621 = vsel %vm229, %v614, 0
    %623 = vmatprep.subr.mxu0 0.0
    %624 = vmatpush1.msra.mxu0 %v225
    %625 = vmatprep.subr.mxu0 0.0
    %626 = vmatpush1.msra.mxu0 0.0
    %627 = vmatprep.subr.mxu0 0.0
    %628 = vmatpush1.msra.mxu0 0.0
    %629 = vmatprep.subr.mxu0 0.0
    %630 = vmatpush1.msra.mxu0 0.0
    %631 = vmatprep.subr.mxu0 0.0
    %632 = vmatpush1.msra.mxu0 0.0
    %633 = vmatprep.subr.mxu0 0.0
    %634 = vmatpush1.msra.mxu0 0.0
    %635 = vmatprep.subr.mxu0 0.0
    %636 = vmatpush1.msra.mxu0 0.0
    %637 = vmatprep.subr.mxu0 0.0
    %638 = vmatpush1.msra.mxu0 0.0
    %639 = vmatprep.subr.mxu0 0.0
    %640 = vmatpush1.msra.mxu0 0.0
    %641 = vmatprep.subr.mxu0 0.0
    %642 = vmatpush1.msra.mxu0 0.0
    %643 = vmatprep.subr.mxu0 0.0
    %644 = vmatpush1.msra.mxu0 0.0
    %645 = vmatprep.subr.mxu0 0.0
    %646 = vmatpush1.msra.mxu0 0.0
    %647 = vmatprep.subr.mxu0 0.0
    %648 = vmatpush1.msra.mxu0 0.0
    %649 = vmatprep.subr.mxu0 0.0
    %650 = vmatpush1.msra.mxu0 0.0
    %651 = vmatprep.subr.mxu0 0.0
    %652 = vmatpush1.msra.mxu0 0.0
    %653 = vmatprep.subr.mxu0 0.0
    %654 = vmatpush1.msra.mxu0 0.0
    %655 = vmatprep.subr.mxu0 0.0
    %656 = vmatpush1.msra.mxu0 0.0
    %657 = vmatprep.subr.mxu0 0.0
    %658 = vmatpush1.msra.mxu0 0.0
    %659 = vmatprep.subr.mxu0 0.0
    %660 = vmatpush1.msra.mxu0 0.0
    %661 = vmatprep.subr.mxu0 0.0
    %662 = vmatpush1.msra.mxu0 0.0
    %663 = vmatprep.subr.mxu0 0.0
    %664 = vmatpush1.msra.mxu0 0.0
    %665 = vmatprep.subr.mxu0 0.0
    %666 = vmatpush1.msra.mxu0 0.0
    %667 = vmatprep.subr.mxu0 0.0
    %668 = vmatpush1.msra.mxu0 0.0
    %669 = vmatprep.subr.mxu0 0.0
    %670 = vmatpush1.msra.mxu0 0.0
    %671 = vmatprep.subr.mxu0 0.0
    %672 = vmatpush1.msra.mxu0 0.0
    %673 = vmatprep.subr.mxu0 0.0
    %674 = vmatpush1.msra.mxu0 0.0
    %675 = vmatprep.subr.mxu0 0.0
    %676 = vmatpush1.msra.mxu0 0.0
    %677 = vmatprep.subr.mxu0 0.0
    %678 = vmatpush1.msra.mxu0 0.0
    %679 = vmatprep.subr.mxu0 0.0
    %680 = vmatpush1.msra.mxu0 0.0
    %681 = vmatprep.subr.mxu0 0.0
    %682 = vmatpush1.msra.mxu0 0.0
    %683 = vmatprep.subr.mxu0 0.0
    %684 = vmatpush1.msra.mxu0 0.0
    %685 = vmatprep.subr.mxu0 0.0
    %686 = vmatpush1.msra.mxu0 0.0
    %687 = vmatprep.mubr.f32.mxu0 0.0
    %688 = vmatmul.mubr.f32.gmra.mrb[0].mxu0 %v618
    %v689 = vpop.f32.mrb[0].mxu0
    %v690 = vadd.f32 0.0, %v689
    %v691 = vpop.f32.mrb[0].mxu0
    %692 = vmatprep.mubr.f32.mxu0 0.0
    %693 = vmatmul.mubr.f32.gmra.mrb[0].mxu0 %v621
    %v694 = vpop.f32.mrb[0].mxu0
    %v695 = vadd.f32 0.0, %v694
    %v696 = vpop.f32.mrb[0].mxu0
    %697 = vdwg.mxu0
    %v699 = vsel %vm229, %v409, 0
    %v702 = vsel %vm229, %v414, 0
    %704 = vmatprep.subr.mxu0 0.0
    %705 = vmatpush1.msra.mxu0 %v224
    %706 = vmatprep.subr.mxu0 0.0
    %707 = vmatpush1.msra.mxu0 0.0
    %708 = vmatprep.subr.mxu0 0.0
    %709 = vmatpush1.msra.mxu0 0.0
    %710 = vmatprep.subr.mxu0 0.0
    %711 = vmatpush1.msra.mxu0 0.0
    %712 = vmatprep.subr.mxu0 0.0
    %713 = vmatpush1.msra.mxu0 0.0
    %714 = vmatprep.subr.mxu0 0.0
    %715 = vmatpush1.msra.mxu0 0.0
    %716 = vmatprep.subr.mxu0 0.0
    %717 = vmatpush1.msra.mxu0 0.0
    %718 = vmatprep.subr.mxu0 0.0
    %719 = vmatpush1.msra.mxu0 0.0
    %720 = vmatprep.subr.mxu0 0.0
    %721 = vmatpush1.msra.mxu0 0.0
    %722 = vmatprep.subr.mxu0 0.0
    %723 = vmatpush1.msra.mxu0 0.0
    %724 = vmatprep.subr.mxu0 0.0
    %725 = vmatpush1.msra.mxu0 0.0
    %726 = vmatprep.subr.mxu0 0.0
    %727 = vmatpush1.msra.mxu0 0.0
    %728 = vmatprep.subr.mxu0 0.0
    %729 = vmatpush1.msra.mxu0 0.0
    %730 = vmatprep.subr.mxu0 0.0
    %731 = vmatpush1.msra.mxu0 0.0
    %732 = vmatprep.subr.mxu0 0.0
    %733 = vmatpush1.msra.mxu0 0.0
    %734 = vmatprep.subr.mxu0 0.0
    %735 = vmatpush1.msra.mxu0 0.0
    %736 = vmatprep.subr.mxu0 0.0
    %737 = vmatpush1.msra.mxu0 0.0
    %738 = vmatprep.subr.mxu0 0.0
    %739 = vmatpush1.msra.mxu0 0.0
    %740 = vmatprep.subr.mxu0 0.0
    %741 = vmatpush1.msra.mxu0 0.0
    %742 = vmatprep.subr.mxu0 0.0
    %743 = vmatpush1.msra.mxu0 0.0
    %744 = vmatprep.subr.mxu0 0.0
    %745 = vmatpush1.msra.mxu0 0.0
    %746 = vmatprep.subr.mxu0 0.0
    %747 = vmatpush1.msra.mxu0 0.0
    %748 = vmatprep.subr.mxu0 0.0
    %749 = vmatpush1.msra.mxu0 0.0
    %750 = vmatprep.subr.mxu0 0.0
    %751 = vmatpush1.msra.mxu0 0.0
    %752 = vmatprep.subr.mxu0 0.0
    %753 = vmatpush1.msra.mxu0 0.0
    %754 = vmatprep.subr.mxu0 0.0
    %755 = vmatpush1.msra.mxu0 0.0
    %756 = vmatprep.subr.mxu0 0.0
    %757 = vmatpush1.msra.mxu0 0.0
    %758 = vmatprep.subr.mxu0 0.0
    %759 = vmatpush1.msra.mxu0 0.0
    %760 = vmatprep.subr.mxu0 0.0
    %761 = vmatpush1.msra.mxu0 0.0
    %762 = vmatprep.subr.mxu0 0.0
    %763 = vmatpush1.msra.mxu0 0.0
    %764 = vmatprep.subr.mxu0 0.0
    %765 = vmatpush1.msra.mxu0 0.0
    %766 = vmatprep.subr.mxu0 0.0
    %767 = vmatpush1.msra.mxu0 0.0
    %768 = vmatprep.mubr.f32.mxu0 0.0
    %769 = vmatmul.mubr.f32.gmra.mrb[0].mxu0 %v699
    %v770 = vpop.f32.mrb[0].mxu0
    %v771 = vadd.f32 %v690, %v770
    %v772 = vpop.f32.mrb[0].mxu0
    %773 = vmatprep.mubr.f32.mxu0 0.0
    %774 = vmatmul.mubr.f32.gmra.mrb[0].mxu0 %v702
    %v775 = vpop.f32.mrb[0].mxu0
    %v776 = vadd.f32 %v695, %v775
    %v777 = vpop.f32.mrb[0].mxu0
    %778 = vdwg.mxu0
    %779 = vrot.lane.b32.xlu0 %v161, 112
    %v780 = vpop.permute.xlu0 %779
    %781 = vrot.lane.b32.xlu0 %v166, 112
    %v782 = vpop.permute.xlu0 %781
    %783 = vrot.lane.b32.xlu0 %v161, 80
    %v784 = vpop.permute.xlu0 %783
    %785 = vrot.lane.b32.xlu0 %v166, 80
    %v786 = vpop.permute.xlu0 %785
    %v787 = vsel %vm229, %v780, 0
    %v789 = vsel %vm229, %v782, 0
    %v791 = vsel %vm229, %v784, 0
    %v793 = vsel %vm229, %v786, 0
    %795 = vmatprep.subr.mxu0 0.0
    %796 = vmatpush1.xpose.msra.mxu0 %v791
    %797 = vmatprep.subr.mxu0 0.0
    %798 = vmatpush1.xpose.msra.mxu0 %v793
    %799 = vmatprep.subr.mxu0 0.0
    %800 = vmatpush1.xpose.msra.mxu0 0.0
    %801 = vmatprep.subr.mxu0 0.0
    %802 = vmatpush1.xpose.msra.mxu0 0.0
    %803 = vmatprep.subr.mxu0 0.0
    %804 = vmatpush1.xpose.msra.mxu0 0.0
    %805 = vmatprep.subr.mxu0 0.0
    %806 = vmatpush1.xpose.msra.mxu0 0.0
    %807 = vmatprep.subr.mxu0 0.0
    %808 = vmatpush1.xpose.msra.mxu0 0.0
    %809 = vmatprep.subr.mxu0 0.0
    %810 = vmatpush1.xpose.msra.mxu0 0.0
    %811 = vmatprep.subr.mxu0 0.0
    %812 = vmatpush1.xpose.msra.mxu0 0.0
    %813 = vmatprep.subr.mxu0 0.0
    %814 = vmatpush1.xpose.msra.mxu0 0.0
    %815 = vmatprep.subr.mxu0 0.0
    %816 = vmatpush1.xpose.msra.mxu0 0.0
    %817 = vmatprep.subr.mxu0 0.0
    %818 = vmatpush1.xpose.msra.mxu0 0.0
    %819 = vmatprep.subr.mxu0 0.0
    %820 = vmatpush1.xpose.msra.mxu0 0.0
    %821 = vmatprep.subr.mxu0 0.0
    %822 = vmatpush1.xpose.msra.mxu0 0.0
    %823 = vmatprep.subr.mxu0 0.0
    %824 = vmatpush1.xpose.msra.mxu0 0.0
    %825 = vmatprep.subr.mxu0 0.0
    %826 = vmatpush1.xpose.msra.mxu0 0.0
    %827 = vmatprep.subr.mxu0 0.0
    %828 = vmatpush1.xpose.msra.mxu0 0.0
    %829 = vmatprep.subr.mxu0 0.0
    %830 = vmatpush1.xpose.msra.mxu0 0.0
    %831 = vmatprep.subr.mxu0 0.0
    %832 = vmatpush1.xpose.msra.mxu0 0.0
    %833 = vmatprep.subr.mxu0 0.0
    %834 = vmatpush1.xpose.msra.mxu0 0.0
    %835 = vmatprep.subr.mxu0 0.0
    %836 = vmatpush1.xpose.msra.mxu0 0.0
    %837 = vmatprep.subr.mxu0 0.0
    %838 = vmatpush1.xpose.msra.mxu0 0.0
    %839 = vmatprep.subr.mxu0 0.0
    %840 = vmatpush1.xpose.msra.mxu0 0.0
    %841 = vmatprep.subr.mxu0 0.0
    %842 = vmatpush1.xpose.msra.mxu0 0.0
    %843 = vmatprep.subr.mxu0 0.0
    %844 = vmatpush1.xpose.msra.mxu0 0.0
    %845 = vmatprep.subr.mxu0 0.0
    %846 = vmatpush1.xpose.msra.mxu0 0.0
    %847 = vmatprep.subr.mxu0 0.0
    %848 = vmatpush1.xpose.msra.mxu0 0.0
    %849 = vmatprep.subr.mxu0 0.0
    %850 = vmatpush1.xpose.msra.mxu0 0.0
    %851 = vmatprep.subr.mxu0 0.0
    %852 = vmatpush1.xpose.msra.mxu0 0.0
    %853 = vmatprep.subr.mxu0 0.0
    %854 = vmatpush1.xpose.msra.mxu0 0.0
    %855 = vmatprep.subr.mxu0 0.0
    %856 = vmatpush1.xpose.msra.mxu0 0.0
    %857 = vmatprep.subr.mxu0 0.0
    %858 = vmatpush1.xpose.msra.mxu0 0.0
    %859 = vmatprep.mubr.f32.mxu0 0.0
    %860 = vmatmul.mubr.f32.gmra.mrb[0].mxu0 %v787
    %v861 = vpop.f32.mrb[0].mxu0
    %v862 = vadd.f32 %v222, %v861
    %v863 = vpop.f32.mrb[0].mxu0
    %864 = vmatprep.mubr.f32.mxu0 0.0
    %865 = vmatmul.mubr.f32.gmra.mrb[0].mxu0 %v789
    %v866 = vpop.f32.mrb[0].mxu0
    %v867 = vadd.f32 %v223, %v866
    %v868 = vpop.f32.mrb[0].mxu0
    %869 = vdwg.mxu0
    %v870 = vsel %vm313, %v862, -inf
    %871 = vmax.xlane.f32.xlu0 %v870
    %v872 = vpop.xlane.xlu0 %871
    %v873 = vsel %vm313, %v867, -inf
    %874 = vmax.xlane.f32.xlu0 %v873
    %v875 = vpop.xlane.xlu0 %874
    %v876 = vsub.f32 %v862, %v872
    %v877 = vsub.f32 %v867, %v875
    %v878 = vmul.f32 %v876, 1.442695
    %v879 = vpow.pop %v878
    %v880 = vmul.f32 %v877, 1.442695
    %v881 = vpow.pop %v880
    %v882 = vsel %vm313, %v879, 0.0
    %883 = vadd.xlane.f32.xlu0 %v882
    %v884 = vpop.xlane.xlu0 %883
    %v885 = vsel %vm313, %v881, 0.0
    %886 = vadd.xlane.f32.xlu0 %v885
    %v887 = vpop.xlane.xlu0 %886
    %v888 = vrcp.pop %v884
    %v889 = vmul.f32 %v879, %v888
    %v890 = vrcp.pop %v887
    %v891 = vmul.f32 %v881, %v890
    %892 = vrot.lane.b32.xlu0 %v161, 48
    %v893 = vpop.permute.xlu0 %892
    %894 = vrot.lane.b32.xlu0 %v166, 48
    %v895 = vpop.permute.xlu0 %894
    %v899 = vsel %vm313, %v889, 0
    %v902 = vsel %vm313, %v891, 0
    %904 = vmatprep.subr.mxu0 0.0
    %905 = vmatpush1.msra.mxu0 %v893
    %906 = vmatprep.subr.mxu0 0.0
    %907 = vmatpush1.msra.mxu0 %v895
    %908 = vmatprep.subr.mxu0 0.0
    %909 = vmatpush1.msra.mxu0 0.0
    %910 = vmatprep.subr.mxu0 0.0
    %911 = vmatpush1.msra.mxu0 0.0
    %912 = vmatprep.subr.mxu0 0.0
    %913 = vmatpush1.msra.mxu0 0.0
    %914 = vmatprep.subr.mxu0 0.0
    %915 = vmatpush1.msra.mxu0 0.0
    %916 = vmatprep.subr.mxu0 0.0
    %917 = vmatpush1.msra.mxu0 0.0
    %918 = vmatprep.subr.mxu0 0.0
    %919 = vmatpush1.msra.mxu0 0.0
    %920 = vmatprep.subr.mxu0 0.0
    %921 = vmatpush1.msra.mxu0 0.0
    %922 = vmatprep.subr.mxu0 0.0
    %923 = vmatpush1.msra.mxu0 0.0
    %924 = vmatprep.subr.mxu0 0.0
    %925 = vmatpush1.msra.mxu0 0.0
    %926 = vmatprep.subr.mxu0 0.0
    %927 = vmatpush1.msra.mxu0 0.0
    %928 = vmatprep.subr.mxu0 0.0
    %929 = vmatpush1.msra.mxu0 0.0
    %930 = vmatprep.subr.mxu0 0.0
    %931 = vmatpush1.msra.mxu0 0.0
    %932 = vmatprep.subr.mxu0 0.0
    %933 = vmatpush1.msra.mxu0 0.0
    %934 = vmatprep.subr.mxu0 0.0
    %935 = vmatpush1.msra.mxu0 0.0
    %936 = vmatprep.subr.mxu0 0.0
    %937 = vmatpush1.msra.mxu0 0.0
    %938 = vmatprep.subr.mxu0 0.0
    %939 = vmatpush1.msra.mxu0 0.0
    %940 = vmatprep.subr.mxu0 0.0
    %941 = vmatpush1.msra.mxu0 0.0
    %942 = vmatprep.subr.mxu0 0.0
    %943 = vmatpush1.msra.mxu0 0.0
    %944 = vmatprep.subr.mxu0 0.0
    %945 = vmatpush1.msra.mxu0 0.0
    %946 = vmatprep.subr.mxu0 0.0
    %947 = vmatpush1.msra.mxu0 0.0
    %948 = vmatprep.subr.mxu0 0.0
    %949 = vmatpush1.msra.mxu0 0.0
    %950 = vmatprep.subr.mxu0 0.0
    %951 = vmatpush1.msra.mxu0 0.0
    %952 = vmatprep.subr.mxu0 0.0
    %953 = vmatpush1.msra.mxu0 0.0
    %954 = vmatprep.subr.mxu0 0.0
    %955 = vmatpush1.msra.mxu0 0.0
    %956 = vmatprep.subr.mxu0 0.0
    %957 = vmatpush1.msra.mxu0 0.0
    %958 = vmatprep.subr.mxu0 0.0
    %959 = vmatpush1.msra.mxu0 0.0
    %960 = vmatprep.subr.mxu0 0.0
    %961 = vmatpush1.msra.mxu0 0.0
    %962 = vmatprep.subr.mxu0 0.0
    %963 = vmatpush1.msra.mxu0 0.0
    %964 = vmatprep.subr.mxu0 0.0
    %965 = vmatpush1.msra.mxu0 0.0
    %966 = vmatprep.subr.mxu0 0.0
    %967 = vmatpush1.msra.mxu0 0.0
    %968 = vmatprep.mubr.f32.mxu0 0.0
    %969 = vmatmul.mubr.f32.gmra.mrb[0].mxu0 %v899
    %v970 = vpop.f32.mrb[0].mxu0
    %v971 = vadd.f32 0.0, %v970
    %v972 = vpop.f32.mrb[0].mxu0
    %973 = vmatprep.mubr.f32.mxu0 0.0
    %974 = vmatmul.mubr.f32.gmra.mrb[0].mxu0 %v902
    %v975 = vpop.f32.mrb[0].mxu0
    %v976 = vadd.f32 0.0, %v975
    %v977 = vpop.f32.mrb[0].mxu0
    %978 = vdwg.mxu0
    %v980 = vsel %vm229, %v971, 0
    %v983 = vsel %vm229, %v976, 0
    %985 = vmatprep.subr.mxu0 0.0
    %986 = vmatpush1.msra.mxu0 %v226
    %987 = vmatprep.subr.mxu0 0.0
    %988 = vmatpush1.msra.mxu0 0.0
    %989 = vmatprep.subr.mxu0 0.0
    %990 = vmatpush1.msra.mxu0 0.0
    %991 = vmatprep.subr.mxu0 0.0
    %992 = vmatpush1.msra.mxu0 0.0
    %993 = vmatprep.subr.mxu0 0.0
    %994 = vmatpush1.msra.mxu0 0.0
    %995 = vmatprep.subr.mxu0 0.0
    %996 = vmatpush1.msra.mxu0 0.0
    %997 = vmatprep.subr.mxu0 0.0
    %998 = vmatpush1.msra.mxu0 0.0
    %999 = vmatprep.subr.mxu0 0.0
    %1000 = vmatpush1.msra.mxu0 0.0
    %1001 = vmatprep.subr.mxu0 0.0
    %1002 = vmatpush1.msra.mxu0 0.0
    %1003 = vmatprep.subr.mxu0 0.0
    %1004 = vmatpush1.msra.mxu0 0.0
    %1005 = vmatprep.subr.mxu0 0.0
    %1006 = vmatpush1.msra.mxu0 0.0
    %1007 = vmatprep.subr.mxu0 0.0
    %1008 = vmatpush1.msra.mxu0 0.0
    %1009 = vmatprep.subr.mxu0 0.0
    %1010 = vmatpush1.msra.mxu0 0.0
    %1011 = vmatprep.subr.mxu0 0.0
    %1012 = vmatpush1.msra.mxu0 0.0
    %1013 = vmatprep.subr.mxu0 0.0
    %1014 = vmatpush1.msra.mxu0 0.0
    %1015 = vmatprep.subr.mxu0 0.0
    %1016 = vmatpush1.msra.mxu0 0.0
    %1017 = vmatprep.subr.mxu0 0.0
    %1018 = vmatpush1.msra.mxu0 0.0
    %1019 = vmatprep.subr.mxu0 0.0
    %1020 = vmatpush1.msra.mxu0 0.0
    %1021 = vmatprep.subr.mxu0 0.0
    %1022 = vmatpush1.msra.mxu0 0.0
    %1023 = vmatprep.subr.mxu0 0.0
    %1024 = vmatpush1.msra.mxu0 0.0
    %1025 = vmatprep.subr.mxu0 0.0
    %1026 = vmatpush1.msra.mxu0 0.0
    %1027 = vmatprep.subr.mxu0 0.0
    %1028 = vmatpush1.msra.mxu0 0.0
    %1029 = vmatprep.subr.mxu0 0.0
    %1030 = vmatpush1.msra.mxu0 0.0
    %1031 = vmatprep.subr.mxu0 0.0
    %1032 = vmatpush1.msra.mxu0 0.0
    %1033 = vmatprep.subr.mxu0 0.0
    %1034 = vmatpush1.msra.mxu0 0.0
    %1035 = vmatprep.subr.mxu0 0.0
    %1036 = vmatpush1.msra.mxu0 0.0
    %1037 = vmatprep.subr.mxu0 0.0
    %1038 = vmatpush1.msra.mxu0 0.0
    %1039 = vmatprep.subr.mxu0 0.0
    %1040 = vmatpush1.msra.mxu0 0.0
    %1041 = vmatprep.subr.mxu0 0.0
    %1042 = vmatpush1.msra.mxu0 0.0
    %1043 = vmatprep.subr.mxu0 0.0
    %1044 = vmatpush1.msra.mxu0 0.0
    %1045 = vmatprep.subr.mxu0 0.0
    %1046 = vmatpush1.msra.mxu0 0.0
    %1047 = vmatprep.subr.mxu0 0.0
    %1048 = vmatpush1.msra.mxu0 0.0
    %1049 = vmatprep.mubr.f32.mxu0 0.0
    %1050 = vmatmul.mubr.f32.gmra.mrb[0].mxu0 %v980
    %v1051 = vpop.f32.mrb[0].mxu0
    %v1052 = vadd.f32 0.0, %v1051
    %v1053 = vpop.f32.mrb[0].mxu0
    %1054 = vmatprep.mubr.f32.mxu0 0.0
    %1055 = vmatmul.mubr.f32.gmra.mrb[0].mxu0 %v983
    %v1056 = vpop.f32.mrb[0].mxu0
    %v1057 = vadd.f32 0.0, %v1056
    %v1058 = vpop.f32.mrb[0].mxu0
    %1059 = vdwg.mxu0
    %v1060 = vadd.f32 %v771, %v1052
    %v1061 = vadd.f32 %v776, %v1057
    %1062 = vrot.lane.b32.xlu0 %v161, 104
    %v1063 = vpop.permute.xlu0 %1062
    %1064 = vrot.lane.b32.xlu0 %v166, 104
    %v1065 = vpop.permute.xlu0 %1064
    %1066 = vrot.lane.b32.xlu0 %v161, 72
    %v1067 = vpop.permute.xlu0 %1066
    %1068 = vrot.lane.b32.xlu0 %v166, 72
    %v1069 = vpop.permute.xlu0 %1068
    %v1070 = vsel %vm229, %v1063, 0
    %v1072 = vsel %vm229, %v1065, 0
    %v1074 = vsel %vm229, %v1067, 0
    %v1076 = vsel %vm229, %v1069, 0
    %1078 = vmatprep.subr.mxu0 0.0
    %1079 = vmatpush1.xpose.msra.mxu0 %v1074
    %1080 = vmatprep.subr.mxu0 0.0
    %1081 = vmatpush1.xpose.msra.mxu0 %v1076
    %1082 = vmatprep.subr.mxu0 0.0
    %1083 = vmatpush1.xpose.msra.mxu0 0.0
    %1084 = vmatprep.subr.mxu0 0.0
    %1085 = vmatpush1.xpose.msra.mxu0 0.0
    %1086 = vmatprep.subr.mxu0 0.0
    %1087 = vmatpush1.xpose.msra.mxu0 0.0
    %1088 = vmatprep.subr.mxu0 0.0
    %1089 = vmatpush1.xpose.msra.mxu0 0.0
    %1090 = vmatprep.subr.mxu0 0.0
    %1091 = vmatpush1.xpose.msra.mxu0 0.0
    %1092 = vmatprep.subr.mxu0 0.0
    %1093 = vmatpush1.xpose.msra.mxu0 0.0
    %1094 = vmatprep.subr.mxu0 0.0
    %1095 = vmatpush1.xpose.msra.mxu0 0.0
    %1096 = vmatprep.subr.mxu0 0.0
    %1097 = vmatpush1.xpose.msra.mxu0 0.0
    %1098 = vmatprep.subr.mxu0 0.0
    %1099 = vmatpush1.xpose.msra.mxu0 0.0
    %1100 = vmatprep.subr.mxu0 0.0
    %1101 = vmatpush1.xpose.msra.mxu0 0.0
    %1102 = vmatprep.subr.mxu0 0.0
    %1103 = vmatpush1.xpose.msra.mxu0 0.0
    %1104 = vmatprep.subr.mxu0 0.0
    %1105 = vmatpush1.xpose.msra.mxu0 0.0
    %1106 = vmatprep.subr.mxu0 0.0
    %1107 = vmatpush1.xpose.msra.mxu0 0.0
    %1108 = vmatprep.subr.mxu0 0.0
    %1109 = vmatpush1.xpose.msra.mxu0 0.0
    %1110 = vmatprep.subr.mxu0 0.0
    %1111 = vmatpush1.xpose.msra.mxu0 0.0
    %1112 = vmatprep.subr.mxu0 0.0
    %1113 = vmatpush1.xpose.msra.mxu0 0.0
    %1114 = vmatprep.subr.mxu0 0.0
    %1115 = vmatpush1.xpose.msra.mxu0 0.0
    %1116 = vmatprep.subr.mxu0 0.0
    %1117 = vmatpush1.xpose.msra.mxu0 0.0
    %1118 = vmatprep.subr.mxu0 0.0
    %1119 = vmatpush1.xpose.msra.mxu0 0.0
    %1120 = vmatprep.subr.mxu0 0.0
    %1121 = vmatpush1.xpose.msra.mxu0 0.0
    %1122 = vmatprep.subr.mxu0 0.0
    %1123 = vmatpush1.xpose.msra.mxu0 0.0
    %1124 = vmatprep.subr.mxu0 0.0
    %1125 = vmatpush1.xpose.msra.mxu0 0.0
    %1126 = vmatprep.subr.mxu0 0.0
    %1127 = vmatpush1.xpose.msra.mxu0 0.0
    %1128 = vmatprep.subr.mxu0 0.0
    %1129 = vmatpush1.xpose.msra.mxu0 0.0
    %1130 = vmatprep.subr.mxu0 0.0
    %1131 = vmatpush1.xpose.msra.mxu0 0.0
    %1132 = vmatprep.subr.mxu0 0.0
    %1133 = vmatpush1.xpose.msra.mxu0 0.0
    %1134 = vmatprep.subr.mxu0 0.0
    %1135 = vmatpush1.xpose.msra.mxu0 0.0
    %1136 = vmatprep.subr.mxu0 0.0
    %1137 = vmatpush1.xpose.msra.mxu0 0.0
    %1138 = vmatprep.subr.mxu0 0.0
    %1139 = vmatpush1.xpose.msra.mxu0 0.0
    %1140 = vmatprep.subr.mxu0 0.0
    %1141 = vmatpush1.xpose.msra.mxu0 0.0
    %1142 = vmatprep.mubr.f32.mxu0 0.0
    %1143 = vmatmul.mubr.f32.gmra.mrb[0].mxu0 %v1070
    %v1144 = vpop.f32.mrb[0].mxu0
    %v1145 = vadd.f32 %v222, %v1144
    %v1146 = vpop.f32.mrb[0].mxu0
    %1147 = vmatprep.mubr.f32.mxu0 0.0
    %1148 = vmatmul.mubr.f32.gmra.mrb[0].mxu0 %v1072
    %v1149 = vpop.f32.mrb[0].mxu0
    %v1150 = vadd.f32 %v223, %v1149
    %v1151 = vpop.f32.mrb[0].mxu0
    %1152 = vdwg.mxu0
    %v1153 = vsel %vm313, %v1145, -inf
    %1154 = vmax.xlane.f32.xlu0 %v1153
    %v1155 = vpop.xlane.xlu0 %1154
    %v1156 = vsel %vm313, %v1150, -inf
    %1157 = vmax.xlane.f32.xlu0 %v1156
    %v1158 = vpop.xlane.xlu0 %1157
    %v1159 = vsub.f32 %v1145, %v1155
    %v1160 = vsub.f32 %v1150, %v1158
    %v1161 = vmul.f32 %v1159, 1.442695
    %v1162 = vpow.pop %v1161
    %v1163 = vmul.f32 %v1160, 1.442695
    %v1164 = vpow.pop %v1163
    %v1165 = vsel %vm313, %v1162, 0.0
    %1166 = vadd.xlane.f32.xlu0 %v1165
    %v1167 = vpop.xlane.xlu0 %1166
    %v1168 = vsel %vm313, %v1164, 0.0
    %1169 = vadd.xlane.f32.xlu0 %v1168
    %v1170 = vpop.xlane.xlu0 %1169
    %v1171 = vrcp.pop %v1167
    %v1172 = vmul.f32 %v1162, %v1171
    %v1173 = vrcp.pop %v1170
    %v1174 = vmul.f32 %v1164, %v1173
    %1175 = vrot.lane.b32.xlu0 %v161, 40
    %v1176 = vpop.permute.xlu0 %1175
    %1177 = vrot.lane.b32.xlu0 %v166, 40
    %v1178 = vpop.permute.xlu0 %1177
    %v1182 = vsel %vm313, %v1172, 0
    %v1185 = vsel %vm313, %v1174, 0
    %1187 = vmatprep.subr.mxu0 0.0
    %1188 = vmatpush1.msra.mxu0 %v1176
    %1189 = vmatprep.subr.mxu0 0.0
    %1190 = vmatpush1.msra.mxu0 %v1178
    %1191 = vmatprep.subr.mxu0 0.0
    %1192 = vmatpush1.msra.mxu0 0.0
    %1193 = vmatprep.subr.mxu0 0.0
    %1194 = vmatpush1.msra.mxu0 0.0
    %1195 = vmatprep.subr.mxu0 0.0
    %1196 = vmatpush1.msra.mxu0 0.0
    %1197 = vmatprep.subr.mxu0 0.0
    %1198 = vmatpush1.msra.mxu0 0.0
    %1199 = vmatprep.subr.mxu0 0.0
    %1200 = vmatpush1.msra.mxu0 0.0
    %1201 = vmatprep.subr.mxu0 0.0
    %1202 = vmatpush1.msra.mxu0 0.0
    %1203 = vmatprep.subr.mxu0 0.0
    %1204 = vmatpush1.msra.mxu0 0.0
    %1205 = vmatprep.subr.mxu0 0.0
    %1206 = vmatpush1.msra.mxu0 0.0
    %1207 = vmatprep.subr.mxu0 0.0
    %1208 = vmatpush1.msra.mxu0 0.0
    %1209 = vmatprep.subr.mxu0 0.0
    %1210 = vmatpush1.msra.mxu0 0.0
    %1211 = vmatprep.subr.mxu0 0.0
    %1212 = vmatpush1.msra.mxu0 0.0
    %1213 = vmatprep.subr.mxu0 0.0
    %1214 = vmatpush1.msra.mxu0 0.0
    %1215 = vmatprep.subr.mxu0 0.0
    %1216 = vmatpush1.msra.mxu0 0.0
    %1217 = vmatprep.subr.mxu0 0.0
    %1218 = vmatpush1.msra.mxu0 0.0
    %1219 = vmatprep.subr.mxu0 0.0
    %1220 = vmatpush1.msra.mxu0 0.0
    %1221 = vmatprep.subr.mxu0 0.0
    %1222 = vmatpush1.msra.mxu0 0.0
    %1223 = vmatprep.subr.mxu0 0.0
    %1224 = vmatpush1.msra.mxu0 0.0
    %1225 = vmatprep.subr.mxu0 0.0
    %1226 = vmatpush1.msra.mxu0 0.0
    %1227 = vmatprep.subr.mxu0 0.0
    %1228 = vmatpush1.msra.mxu0 0.0
    %1229 = vmatprep.subr.mxu0 0.0
    %1230 = vmatpush1.msra.mxu0 0.0
    %1231 = vmatprep.subr.mxu0 0.0
    %1232 = vmatpush1.msra.mxu0 0.0
    %1233 = vmatprep.subr.mxu0 0.0
    %1234 = vmatpush1.msra.mxu0 0.0
    %1235 = vmatprep.subr.mxu0 0.0
    %1236 = vmatpush1.msra.mxu0 0.0
    %1237 = vmatprep.subr.mxu0 0.0
    %1238 = vmatpush1.msra.mxu0 0.0
    %1239 = vmatprep.subr.mxu0 0.0
    %1240 = vmatpush1.msra.mxu0 0.0
    %1241 = vmatprep.subr.mxu0 0.0
    %1242 = vmatpush1.msra.mxu0 0.0
    %1243 = vmatprep.subr.mxu0 0.0
    %1244 = vmatpush1.msra.mxu0 0.0
    %1245 = vmatprep.subr.mxu0 0.0
    %1246 = vmatpush1.msra.mxu0 0.0
    %1247 = vmatprep.subr.mxu0 0.0
    %1248 = vmatpush1.msra.mxu0 0.0
    %1249 = vmatprep.subr.mxu0 0.0
    %1250 = vmatpush1.msra.mxu0 0.0
    %1251 = vmatprep.mubr.f32.mxu0 0.0
    %1252 = vmatmul.mubr.f32.gmra.mrb[0].mxu0 %v1182
    %v1253 = vpop.f32.mrb[0].mxu0
    %v1254 = vadd.f32 0.0, %v1253
    %v1255 = vpop.f32.mrb[0].mxu0
    %1256 = vmatprep.mubr.f32.mxu0 0.0
    %1257 = vmatmul.mubr.f32.gmra.mrb[0].mxu0 %v1185
    %v1258 = vpop.f32.mrb[0].mxu0
    %v1259 = vadd.f32 0.0, %v1258
    %v1260 = vpop.f32.mrb[0].mxu0
    %1261 = vdwg.mxu0
    %v1263 = vsel %vm229, %v1254, 0
    %v1266 = vsel %vm229, %v1259, 0
    %1268 = vmatprep.subr.mxu0 0.0
    %1269 = vmatpush1.msra.mxu0 %v227
    %1270 = vmatprep.subr.mxu0 0.0
    %1271 = vmatpush1.msra.mxu0 0.0
    %1272 = vmatprep.subr.mxu0 0.0
    %1273 = vmatpush1.msra.mxu0 0.0
    %1274 = vmatprep.subr.mxu0 0.0
    %1275 = vmatpush1.msra.mxu0 0.0
    %1276 = vmatprep.subr.mxu0 0.0
    %1277 = vmatpush1.msra.mxu0 0.0
    %1278 = vmatprep.subr.mxu0 0.0
    %1279 = vmatpush1.msra.mxu0 0.0
    %1280 = vmatprep.subr.mxu0 0.0
    %1281 = vmatpush1.msra.mxu0 0.0
    %1282 = vmatprep.subr.mxu0 0.0
    %1283 = vmatpush1.msra.mxu0 0.0
    %1284 = vmatprep.subr.mxu0 0.0
    %1285 = vmatpush1.msra.mxu0 0.0
    %1286 = vmatprep.subr.mxu0 0.0
    %1287 = vmatpush1.msra.mxu0 0.0
    %1288 = vmatprep.subr.mxu0 0.0
    %1289 = vmatpush1.msra.mxu0 0.0
    %1290 = vmatprep.subr.mxu0 0.0
    %1291 = vmatpush1.msra.mxu0 0.0
    %1292 = vmatprep.subr.mxu0 0.0
    %1293 = vmatpush1.msra.mxu0 0.0
    %1294 = vmatprep.subr.mxu0 0.0
    %1295 = vmatpush1.msra.mxu0 0.0
    %1296 = vmatprep.subr.mxu0 0.0
    %1297 = vmatpush1.msra.mxu0 0.0
    %1298 = vmatprep.subr.mxu0 0.0
    %1299 = vmatpush1.msra.mxu0 0.0
    %1300 = vmatprep.subr.mxu0 0.0
    %1301 = vmatpush1.msra.mxu0 0.0
    %1302 = vmatprep.subr.mxu0 0.0
    %1303 = vmatpush1.msra.mxu0 0.0
    %1304 = vmatprep.subr.mxu0 0.0
    %1305 = vmatpush1.msra.mxu0 0.0
    %1306 = vmatprep.subr.mxu0 0.0
    %1307 = vmatpush1.msra.mxu0 0.0
    %1308 = vmatprep.subr.mxu0 0.0
    %1309 = vmatpush1.msra.mxu0 0.0
    %1310 = vmatprep.subr.mxu0 0.0
    %1311 = vmatpush1.msra.mxu0 0.0
    %1312 = vmatprep.subr.mxu0 0.0
    %1313 = vmatpush1.msra.mxu0 0.0
    %1314 = vmatprep.subr.mxu0 0.0
    %1315 = vmatpush1.msra.mxu0 0.0
    %1316 = vmatprep.subr.mxu0 0.0
    %1317 = vmatpush1.msra.mxu0 0.0
    %1318 = vmatprep.subr.mxu0 0.0
    %1319 = vmatpush1.msra.mxu0 0.0
    %1320 = vmatprep.subr.mxu0 0.0
    %1321 = vmatpush1.msra.mxu0 0.0
    %1322 = vmatprep.subr.mxu0 0.0
    %1323 = vmatpush1.msra.mxu0 0.0
    %1324 = vmatprep.subr.mxu0 0.0
    %1325 = vmatpush1.msra.mxu0 0.0
    %1326 = vmatprep.subr.mxu0 0.0
    %1327 = vmatpush1.msra.mxu0 0.0
    %1328 = vmatprep.subr.mxu0 0.0
    %1329 = vmatpush1.msra.mxu0 0.0
    %1330 = vmatprep.subr.mxu0 0.0
    %1331 = vmatpush1.msra.mxu0 0.0
    %1332 = vmatprep.mubr.f32.mxu0 0.0
    %1333 = vmatmul.mubr.f32.gmra.mrb[0].mxu0 %v1263
    %v1334 = vpop.f32.mrb[0].mxu0
    %v1335 = vadd.f32 0.0, %v1334
    %v1336 = vpop.f32.mrb[0].mxu0
    %1337 = vmatprep.mubr.f32.mxu0 0.0
    %1338 = vmatmul.mubr.f32.gmra.mrb[0].mxu0 %v1266
    %v1339 = vpop.f32.mrb[0].mxu0
    %v1340 = vadd.f32 0.0, %v1339
    %v1341 = vpop.f32.mrb[0].mxu0
    %1342 = vdwg.mxu0
    %v1343 = vadd.f32 %v1060, %v1335
    %v1344 = vadd.f32 %v1061, %v1340
    %v1346 = vlaneseq
    %v1347 = vshrl.u32 %v1346, 7
    %v1348 = vsub.s32 0, %v1347
    %v1349 = vrot.slane %v228, %v1348
    %v1351 = vadd.f32 %v1343, %v1349
    %v1352 = vadd.f32 %v1344, %v1349
    %1353 = vst.msk [vmem:[#allocation8] sm:$0xff] %vm81, %v1351
    %1354 = vst.msk [vmem:[#allocation8 + $0x8] sm:$0xff] %vm81, %v1352
    %v1355 = vsel %vm229, %v171, 0
    %v1357 = vsel %vm229, %v176, 0
    %v1359 = vsel %vm229, %v188, 0
    %v1361 = vsel %vm229, %v190, 0
    %1363 = vmatprep.subr.mxu0 0.0
    %1364 = vmatpush1.xpose.msra.mxu0 %v1359
    %1365 = vmatprep.subr.mxu0 0.0
    %1366 = vmatpush1.xpose.msra.mxu0 %v1361
    %1367 = vmatprep.subr.mxu0 0.0
    %1368 = vmatpush1.xpose.msra.mxu0 0.0
    %1369 = vmatprep.subr.mxu0 0.0
    %1370 = vmatpush1.xpose.msra.mxu0 0.0
    %1371 = vmatprep.subr.mxu0 0.0
    %1372 = vmatpush1.xpose.msra.mxu0 0.0
    %1373 = vmatprep.subr.mxu0 0.0
    %1374 = vmatpush1.xpose.msra.mxu0 0.0
    %1375 = vmatprep.subr.mxu0 0.0
    %1376 = vmatpush1.xpose.msra.mxu0 0.0
    %1377 = vmatprep.subr.mxu0 0.0
    %1378 = vmatpush1.xpose.msra.mxu0 0.0
    %1379 = vmatprep.subr.mxu0 0.0
    %1380 = vmatpush1.xpose.msra.mxu0 0.0
    %1381 = vmatprep.subr.mxu0 0.0
    %1382 = vmatpush1.xpose.msra.mxu0 0.0
    %1383 = vmatprep.subr.mxu0 0.0
    %1384 = vmatpush1.xpose.msra.mxu0 0.0
    %1385 = vmatprep.subr.mxu0 0.0
    %1386 = vmatpush1.xpose.msra.mxu0 0.0
    %1387 = vmatprep.subr.mxu0 0.0
    %1388 = vmatpush1.xpose.msra.mxu0 0.0
    %1389 = vmatprep.subr.mxu0 0.0
    %1390 = vmatpush1.xpose.msra.mxu0 0.0
    %1391 = vmatprep.subr.mxu0 0.0
    %1392 = vmatpush1.xpose.msra.mxu0 0.0
    %1393 = vmatprep.subr.mxu0 0.0
    %1394 = vmatpush1.xpose.msra.mxu0 0.0
    %1395 = vmatprep.subr.mxu0 0.0
    %1396 = vmatpush1.xpose.msra.mxu0 0.0
    %1397 = vmatprep.subr.mxu0 0.0
    %1398 = vmatpush1.xpose.msra.mxu0 0.0
    %1399 = vmatprep.subr.mxu0 0.0
    %1400 = vmatpush1.xpose.msra.mxu0 0.0
    %1401 = vmatprep.subr.mxu0 0.0
    %1402 = vmatpush1.xpose.msra.mxu0 0.0
    %1403 = vmatprep.subr.mxu0 0.0
    %1404 = vmatpush1.xpose.msra.mxu0 0.0
    %1405 = vmatprep.subr.mxu0 0.0
    %1406 = vmatpush1.xpose.msra.mxu0 0.0
    %1407 = vmatprep.subr.mxu0 0.0
    %1408 = vmatpush1.xpose.msra.mxu0 0.0
    %1409 = vmatprep.subr.mxu0 0.0
    %1410 = vmatpush1.xpose.msra.mxu0 0.0
    %1411 = vmatprep.subr.mxu0 0.0
    %1412 = vmatpush1.xpose.msra.mxu0 0.0
    %1413 = vmatprep.subr.mxu0 0.0
    %1414 = vmatpush1.xpose.msra.mxu0 0.0
    %1415 = vmatprep.subr.mxu0 0.0
    %1416 = vmatpush1.xpose.msra.mxu0 0.0
    %1417 = vmatprep.subr.mxu0 0.0
    %1418 = vmatpush1.xpose.msra.mxu0 0.0
    %1419 = vmatprep.subr.mxu0 0.0
    %1420 = vmatpush1.xpose.msra.mxu0 0.0
    %1421 = vmatprep.subr.mxu0 0.0
    %1422 = vmatpush1.xpose.msra.mxu0 0.0
    %1423 = vmatprep.subr.mxu0 0.0
    %1424 = vmatpush1.xpose.msra.mxu0 0.0
    %1425 = vmatprep.subr.mxu0 0.0
    %1426 = vmatpush1.xpose.msra.mxu0 0.0
    %1427 = vmatprep.mubr.f32.mxu0 0.0
    %1428 = vmatmul.mubr.f32.gmra.mrb[0].mxu0 %v1355
    %v1429 = vpop.f32.mrb[0].mxu0
    %v1430 = vadd.f32 %v222, %v1429
    %v1431 = vpop.f32.mrb[0].mxu0
    %1432 = vmatprep.mubr.f32.mxu0 0.0
    %1433 = vmatmul.mubr.f32.gmra.mrb[0].mxu0 %v1357
    %v1434 = vpop.f32.mrb[0].mxu0
    %v1435 = vadd.f32 %v223, %v1434
    %v1436 = vpop.f32.mrb[0].mxu0
    %1437 = vdwg.mxu0
    %v1438 = vsel %vm313, %v1430, -inf
    %1439 = vmax.xlane.f32.xlu0 %v1438
    %v1440 = vpop.xlane.xlu0 %1439
    %v1441 = vsel %vm313, %v1435, -inf
    %1442 = vmax.xlane.f32.xlu0 %v1441
    %v1443 = vpop.xlane.xlu0 %1442
    %v1444 = vsub.f32 %v1430, %v1440
    %v1445 = vsub.f32 %v1435, %v1443
    %v1446 = vmul.f32 %v1444, 1.442695
    %v1447 = vpow.pop %v1446
    %v1448 = vmul.f32 %v1445, 1.442695
    %v1449 = vpow.pop %v1448
    %v1450 = vsel %vm313, %v1447, 0.0
    %1451 = vadd.xlane.f32.xlu0 %v1450
    %v1452 = vpop.xlane.xlu0 %1451
    %v1453 = vsel %vm313, %v1449, 0.0
    %1454 = vadd.xlane.f32.xlu0 %v1453
    %v1455 = vpop.xlane.xlu0 %1454
    %v1456 = vrcp.pop %v1452
    %v1457 = vmul.f32 %v1447, %v1456
    %v1458 = vrcp.pop %v1455
    %v1459 = vmul.f32 %v1449, %v1458
    %v1461 = vsel %vm313, %v1457, 0
    %v1464 = vsel %vm313, %v1459, 0
    %1466 = vmatprep.subr.mxu0 0.0
    %1467 = vmatpush1.msra.mxu0 %v204
    %1468 = vmatprep.subr.mxu0 0.0
    %1469 = vmatpush1.msra.mxu0 %v206
    %1470 = vmatprep.subr.mxu0 0.0
    %1471 = vmatpush1.msra.mxu0 0.0
    %1472 = vmatprep.subr.mxu0 0.0
    %1473 = vmatpush1.msra.mxu0 0.0
    %1474 = vmatprep.subr.mxu0 0.0
    %1475 = vmatpush1.msra.mxu0 0.0
    %1476 = vmatprep.subr.mxu0 0.0
    %1477 = vmatpush1.msra.mxu0 0.0
    %1478 = vmatprep.subr.mxu0 0.0
    %1479 = vmatpush1.msra.mxu0 0.0
    %1480 = vmatprep.subr.mxu0 0.0
    %1481 = vmatpush1.msra.mxu0 0.0
    %1482 = vmatprep.subr.mxu0 0.0
    %1483 = vmatpush1.msra.mxu0 0.0
    %1484 = vmatprep.subr.mxu0 0.0
    %1485 = vmatpush1.msra.mxu0 0.0
    %1486 = vmatprep.subr.mxu0 0.0
    %1487 = vmatpush1.msra.mxu0 0.0
    %1488 = vmatprep.subr.mxu0 0.0
    %1489 = vmatpush1.msra.mxu0 0.0
    %1490 = vmatprep.subr.mxu0 0.0
    %1491 = vmatpush1.msra.mxu0 0.0
    %1492 = vmatprep.subr.mxu0 0.0
    %1493 = vmatpush1.msra.mxu0 0.0
    %1494 = vmatprep.subr.mxu0 0.0
    %1495 = vmatpush1.msra.mxu0 0.0
    %1496 = vmatprep.subr.mxu0 0.0
    %1497 = vmatpush1.msra.mxu0 0.0
    %1498 = vmatprep.subr.mxu0 0.0
    %1499 = vmatpush1.msra.mxu0 0.0
    %1500 = vmatprep.subr.mxu0 0.0
    %1501 = vmatpush1.msra.mxu0 0.0
    %1502 = vmatprep.subr.mxu0 0.0
    %1503 = vmatpush1.msra.mxu0 0.0
    %1504 = vmatprep.subr.mxu0 0.0
    %1505 = vmatpush1.msra.mxu0 0.0
    %1506 = vmatprep.subr.mxu0 0.0
    %1507 = vmatpush1.msra.mxu0 0.0
    %1508 = vmatprep.subr.mxu0 0.0
    %1509 = vmatpush1.msra.mxu0 0.0
    %1510 = vmatprep.subr.mxu0 0.0
    %1511 = vmatpush1.msra.mxu0 0.0
    %1512 = vmatprep.subr.mxu0 0.0
    %1513 = vmatpush1.msra.mxu0 0.0
    %1514 = vmatprep.subr.mxu0 0.0
    %1515 = vmatpush1.msra.mxu0 0.0
    %1516 = vmatprep.subr.mxu0 0.0
    %1517 = vmatpush1.msra.mxu0 0.0
    %1518 = vmatprep.subr.mxu0 0.0
    %1519 = vmatpush1.msra.mxu0 0.0
    %1520 = vmatprep.subr.mxu0 0.0
    %1521 = vmatpush1.msra.mxu0 0.0
    %1522 = vmatprep.subr.mxu0 0.0
    %1523 = vmatpush1.msra.mxu0 0.0
    %1524 = vmatprep.subr.mxu0 0.0
    %1525 = vmatpush1.msra.mxu0 0.0
    %1526 = vmatprep.subr.mxu0 0.0
    %1527 = vmatpush1.msra.mxu0 0.0
    %1528 = vmatprep.subr.mxu0 0.0
    %1529 = vmatpush1.msra.mxu0 0.0
    %1530 = vmatprep.mubr.f32.mxu0 0.0
    %1531 = vmatmul.mubr.f32.gmra.mrb[0].mxu0 %v1461
    %v1532 = vpop.f32.mrb[0].mxu0
    %v1533 = vadd.f32 0.0, %v1532
    %v1534 = vpop.f32.mrb[0].mxu0
    %1535 = vmatprep.mubr.f32.mxu0 0.0
    %1536 = vmatmul.mubr.f32.gmra.mrb[0].mxu0 %v1464
    %v1537 = vpop.f32.mrb[0].mxu0
    %v1538 = vadd.f32 0.0, %v1537
    %v1539 = vpop.f32.mrb[0].mxu0
    %1540 = vdwg.mxu0
    %1541 = vrot.lane.b32.xlu0 %v171, 120
    %v1542 = vpop.permute.xlu0 %1541
    %1543 = vrot.lane.b32.xlu0 %v176, 120
    %v1544 = vpop.permute.xlu0 %1543
    %1545 = vrot.lane.b32.xlu0 %v171, 88
    %v1546 = vpop.permute.xlu0 %1545
    %1547 = vrot.lane.b32.xlu0 %v176, 88
    %v1548 = vpop.permute.xlu0 %1547
    %v1549 = vsel %vm229, %v1542, 0
    %v1551 = vsel %vm229, %v1544, 0
    %v1553 = vsel %vm229, %v1546, 0
    %v1555 = vsel %vm229, %v1548, 0
    %1557 = vmatprep.subr.mxu0 0.0
    %1558 = vmatpush1.xpose.msra.mxu0 %v1553
    %1559 = vmatprep.subr.mxu0 0.0
    %1560 = vmatpush1.xpose.msra.mxu0 %v1555
    %1561 = vmatprep.subr.mxu0 0.0
    %1562 = vmatpush1.xpose.msra.mxu0 0.0
    %1563 = vmatprep.subr.mxu0 0.0
    %1564 = vmatpush1.xpose.msra.mxu0 0.0
    %1565 = vmatprep.subr.mxu0 0.0
    %1566 = vmatpush1.xpose.msra.mxu0 0.0
    %1567 = vmatprep.subr.mxu0 0.0
    %1568 = vmatpush1.xpose.msra.mxu0 0.0
    %1569 = vmatprep.subr.mxu0 0.0
    %1570 = vmatpush1.xpose.msra.mxu0 0.0
    %1571 = vmatprep.subr.mxu0 0.0
    %1572 = vmatpush1.xpose.msra.mxu0 0.0
    %1573 = vmatprep.subr.mxu0 0.0
    %1574 = vmatpush1.xpose.msra.mxu0 0.0
    %1575 = vmatprep.subr.mxu0 0.0
    %1576 = vmatpush1.xpose.msra.mxu0 0.0
    %1577 = vmatprep.subr.mxu0 0.0
    %1578 = vmatpush1.xpose.msra.mxu0 0.0
    %1579 = vmatprep.subr.mxu0 0.0
    %1580 = vmatpush1.xpose.msra.mxu0 0.0
    %1581 = vmatprep.subr.mxu0 0.0
    %1582 = vmatpush1.xpose.msra.mxu0 0.0
    %1583 = vmatprep.subr.mxu0 0.0
    %1584 = vmatpush1.xpose.msra.mxu0 0.0
    %1585 = vmatprep.subr.mxu0 0.0
    %1586 = vmatpush1.xpose.msra.mxu0 0.0
    %1587 = vmatprep.subr.mxu0 0.0
    %1588 = vmatpush1.xpose.msra.mxu0 0.0
    %1589 = vmatprep.subr.mxu0 0.0
    %1590 = vmatpush1.xpose.msra.mxu0 0.0
    %1591 = vmatprep.subr.mxu0 0.0
    %1592 = vmatpush1.xpose.msra.mxu0 0.0
    %1593 = vmatprep.subr.mxu0 0.0
    %1594 = vmatpush1.xpose.msra.mxu0 0.0
    %1595 = vmatprep.subr.mxu0 0.0
    %1596 = vmatpush1.xpose.msra.mxu0 0.0
    %1597 = vmatprep.subr.mxu0 0.0
    %1598 = vmatpush1.xpose.msra.mxu0 0.0
    %1599 = vmatprep.subr.mxu0 0.0
    %1600 = vmatpush1.xpose.msra.mxu0 0.0
    %1601 = vmatprep.subr.mxu0 0.0
    %1602 = vmatpush1.xpose.msra.mxu0 0.0
    %1603 = vmatprep.subr.mxu0 0.0
    %1604 = vmatpush1.xpose.msra.mxu0 0.0
    %1605 = vmatprep.subr.mxu0 0.0
    %1606 = vmatpush1.xpose.msra.mxu0 0.0
    %1607 = vmatprep.subr.mxu0 0.0
    %1608 = vmatpush1.xpose.msra.mxu0 0.0
    %1609 = vmatprep.subr.mxu0 0.0
    %1610 = vmatpush1.xpose.msra.mxu0 0.0
    %1611 = vmatprep.subr.mxu0 0.0
    %1612 = vmatpush1.xpose.msra.mxu0 0.0
    %1613 = vmatprep.subr.mxu0 0.0
    %1614 = vmatpush1.xpose.msra.mxu0 0.0
    %1615 = vmatprep.subr.mxu0 0.0
    %1616 = vmatpush1.xpose.msra.mxu0 0.0
    %1617 = vmatprep.subr.mxu0 0.0
    %1618 = vmatpush1.xpose.msra.mxu0 0.0
    %1619 = vmatprep.subr.mxu0 0.0
    %1620 = vmatpush1.xpose.msra.mxu0 0.0
    %1621 = vmatprep.mubr.f32.mxu0 0.0
    %1622 = vmatmul.mubr.f32.gmra.mrb[0].mxu0 %v1549
    %v1623 = vpop.f32.mrb[0].mxu0
    %v1624 = vadd.f32 %v222, %v1623
    %v1625 = vpop.f32.mrb[0].mxu0
    %1626 = vmatprep.mubr.f32.mxu0 0.0
    %1627 = vmatmul.mubr.f32.gmra.mrb[0].mxu0 %v1551
    %v1628 = vpop.f32.mrb[0].mxu0
    %v1629 = vadd.f32 %v223, %v1628
    %v1630 = vpop.f32.mrb[0].mxu0
    %1631 = vdwg.mxu0
    %v1632 = vsel %vm313, %v1624, -inf
    %1633 = vmax.xlane.f32.xlu0 %v1632
    %v1634 = vpop.xlane.xlu0 %1633
    %v1635 = vsel %vm313, %v1629, -inf
    %1636 = vmax.xlane.f32.xlu0 %v1635
    %v1637 = vpop.xlane.xlu0 %1636
    %v1638 = vsub.f32 %v1624, %v1634
    %v1639 = vsub.f32 %v1629, %v1637
    %v1640 = vmul.f32 %v1638, 1.442695
    %v1641 = vpow.pop %v1640
    %v1642 = vmul.f32 %v1639, 1.442695
    %v1643 = vpow.pop %v1642
    %v1644 = vsel %vm313, %v1641, 0.0
    %1645 = vadd.xlane.f32.xlu0 %v1644
    %v1646 = vpop.xlane.xlu0 %1645
    %v1647 = vsel %vm313, %v1643, 0.0
    %1648 = vadd.xlane.f32.xlu0 %v1647
    %v1649 = vpop.xlane.xlu0 %1648
    %v1650 = vrcp.pop %v1646
    %v1651 = vmul.f32 %v1641, %v1650
    %v1652 = vrcp.pop %v1649
    %v1653 = vmul.f32 %v1643, %v1652
    %1654 = vrot.lane.b32.xlu0 %v171, 56
    %v1655 = vpop.permute.xlu0 %1654
    %1656 = vrot.lane.b32.xlu0 %v176, 56
    %v1657 = vpop.permute.xlu0 %1656
    %v1661 = vsel %vm313, %v1651, 0
    %v1664 = vsel %vm313, %v1653, 0
    %1666 = vmatprep.subr.mxu0 0.0
    %1667 = vmatpush1.msra.mxu0 %v1655
    %1668 = vmatprep.subr.mxu0 0.0
    %1669 = vmatpush1.msra.mxu0 %v1657
    %1670 = vmatprep.subr.mxu0 0.0
    %1671 = vmatpush1.msra.mxu0 0.0
    %1672 = vmatprep.subr.mxu0 0.0
    %1673 = vmatpush1.msra.mxu0 0.0
    %1674 = vmatprep.subr.mxu0 0.0
    %1675 = vmatpush1.msra.mxu0 0.0
    %1676 = vmatprep.subr.mxu0 0.0
    %1677 = vmatpush1.msra.mxu0 0.0
    %1678 = vmatprep.subr.mxu0 0.0
    %1679 = vmatpush1.msra.mxu0 0.0
    %1680 = vmatprep.subr.mxu0 0.0
    %1681 = vmatpush1.msra.mxu0 0.0
    %1682 = vmatprep.subr.mxu0 0.0
    %1683 = vmatpush1.msra.mxu0 0.0
    %1684 = vmatprep.subr.mxu0 0.0
    %1685 = vmatpush1.msra.mxu0 0.0
    %1686 = vmatprep.subr.mxu0 0.0
    %1687 = vmatpush1.msra.mxu0 0.0
    %1688 = vmatprep.subr.mxu0 0.0
    %1689 = vmatpush1.msra.mxu0 0.0
    %1690 = vmatprep.subr.mxu0 0.0
    %1691 = vmatpush1.msra.mxu0 0.0
    %1692 = vmatprep.subr.mxu0 0.0
    %1693 = vmatpush1.msra.mxu0 0.0
    %1694 = vmatprep.subr.mxu0 0.0
    %1695 = vmatpush1.msra.mxu0 0.0
    %1696 = vmatprep.subr.mxu0 0.0
    %1697 = vmatpush1.msra.mxu0 0.0
    %1698 = vmatprep.subr.mxu0 0.0
    %1699 = vmatpush1.msra.mxu0 0.0
    %1700 = vmatprep.subr.mxu0 0.0
    %1701 = vmatpush1.msra.mxu0 0.0
    %1702 = vmatprep.subr.mxu0 0.0
    %1703 = vmatpush1.msra.mxu0 0.0
    %1704 = vmatprep.subr.mxu0 0.0
    %1705 = vmatpush1.msra.mxu0 0.0
    %1706 = vmatprep.subr.mxu0 0.0
    %1707 = vmatpush1.msra.mxu0 0.0
    %1708 = vmatprep.subr.mxu0 0.0
    %1709 = vmatpush1.msra.mxu0 0.0
    %1710 = vmatprep.subr.mxu0 0.0
    %1711 = vmatpush1.msra.mxu0 0.0
    %1712 = vmatprep.subr.mxu0 0.0
    %1713 = vmatpush1.msra.mxu0 0.0
    %1714 = vmatprep.subr.mxu0 0.0
    %1715 = vmatpush1.msra.mxu0 0.0
    %1716 = vmatprep.subr.mxu0 0.0
    %1717 = vmatpush1.msra.mxu0 0.0
    %1718 = vmatprep.subr.mxu0 0.0
    %1719 = vmatpush1.msra.mxu0 0.0
    %1720 = vmatprep.subr.mxu0 0.0
    %1721 = vmatpush1.msra.mxu0 0.0
    %1722 = vmatprep.subr.mxu0 0.0
    %1723 = vmatpush1.msra.mxu0 0.0
    %1724 = vmatprep.subr.mxu0 0.0
    %1725 = vmatpush1.msra.mxu0 0.0
    %1726 = vmatprep.subr.mxu0 0.0
    %1727 = vmatpush1.msra.mxu0 0.0
    %1728 = vmatprep.subr.mxu0 0.0
    %1729 = vmatpush1.msra.mxu0 0.0
    %1730 = vmatprep.mubr.f32.mxu0 0.0
    %1731 = vmatmul.mubr.f32.gmra.mrb[0].mxu0 %v1661
    %v1732 = vpop.f32.mrb[0].mxu0
    %v1733 = vadd.f32 0.0, %v1732
    %v1734 = vpop.f32.mrb[0].mxu0
    %1735 = vmatprep.mubr.f32.mxu0 0.0
    %1736 = vmatmul.mubr.f32.gmra.mrb[0].mxu0 %v1664
    %v1737 = vpop.f32.mrb[0].mxu0
    %v1738 = vadd.f32 0.0, %v1737
    %v1739 = vpop.f32.mrb[0].mxu0
    %1740 = vdwg.mxu0
    %v1742 = vsel %vm229, %v1733, 0
    %v1745 = vsel %vm229, %v1738, 0
    %1747 = vmatprep.subr.mxu0 0.0
    %1748 = vmatpush1.msra.mxu0 %v225
    %1749 = vmatprep.subr.mxu0 0.0
    %1750 = vmatpush1.msra.mxu0 0.0
    %1751 = vmatprep.subr.mxu0 0.0
    %1752 = vmatpush1.msra.mxu0 0.0
    %1753 = vmatprep.subr.mxu0 0.0
    %1754 = vmatpush1.msra.mxu0 0.0
    %1755 = vmatprep.subr.mxu0 0.0
    %1756 = vmatpush1.msra.mxu0 0.0
    %1757 = vmatprep.subr.mxu0 0.0
    %1758 = vmatpush1.msra.mxu0 0.0
    %1759 = vmatprep.subr.mxu0 0.0
    %1760 = vmatpush1.msra.mxu0 0.0
    %1761 = vmatprep.subr.mxu0 0.0
    %1762 = vmatpush1.msra.mxu0 0.0
    %1763 = vmatprep.subr.mxu0 0.0
    %1764 = vmatpush1.msra.mxu0 0.0
    %1765 = vmatprep.subr.mxu0 0.0
    %1766 = vmatpush1.msra.mxu0 0.0
    %1767 = vmatprep.subr.mxu0 0.0
    %1768 = vmatpush1.msra.mxu0 0.0
    %1769 = vmatprep.subr.mxu0 0.0
    %1770 = vmatpush1.msra.mxu0 0.0
    %1771 = vmatprep.subr.mxu0 0.0
    %1772 = vmatpush1.msra.mxu0 0.0
    %1773 = vmatprep.subr.mxu0 0.0
    %1774 = vmatpush1.msra.mxu0 0.0
    %1775 = vmatprep.subr.mxu0 0.0
    %1776 = vmatpush1.msra.mxu0 0.0
    %1777 = vmatprep.subr.mxu0 0.0
    %1778 = vmatpush1.msra.mxu0 0.0
    %1779 = vmatprep.subr.mxu0 0.0
    %1780 = vmatpush1.msra.mxu0 0.0
    %1781 = vmatprep.subr.mxu0 0.0
    %1782 = vmatpush1.msra.mxu0 0.0
    %1783 = vmatprep.subr.mxu0 0.0
    %1784 = vmatpush1.msra.mxu0 0.0
    %1785 = vmatprep.subr.mxu0 0.0
    %1786 = vmatpush1.msra.mxu0 0.0
    %1787 = vmatprep.subr.mxu0 0.0
    %1788 = vmatpush1.msra.mxu0 0.0
    %1789 = vmatprep.subr.mxu0 0.0
    %1790 = vmatpush1.msra.mxu0 0.0
    %1791 = vmatprep.subr.mxu0 0.0
    %1792 = vmatpush1.msra.mxu0 0.0
    %1793 = vmatprep.subr.mxu0 0.0
    %1794 = vmatpush1.msra.mxu0 0.0
    %1795 = vmatprep.subr.mxu0 0.0
    %1796 = vmatpush1.msra.mxu0 0.0
    %1797 = vmatprep.subr.mxu0 0.0
    %1798 = vmatpush1.msra.mxu0 0.0
    %1799 = vmatprep.subr.mxu0 0.0
    %1800 = vmatpush1.msra.mxu0 0.0
    %1801 = vmatprep.subr.mxu0 0.0
    %1802 = vmatpush1.msra.mxu0 0.0
    %1803 = vmatprep.subr.mxu0 0.0
    %1804 = vmatpush1.msra.mxu0 0.0
    %1805 = vmatprep.subr.mxu0 0.0
    %1806 = vmatpush1.msra.mxu0 0.0
    %1807 = vmatprep.subr.mxu0 0.0
    %1808 = vmatpush1.msra.mxu0 0.0
    %1809 = vmatprep.subr.mxu0 0.0
    %1810 = vmatpush1.msra.mxu0 0.0
    %1811 = vmatprep.mubr.f32.mxu0 0.0
    %1812 = vmatmul.mubr.f32.gmra.mrb[0].mxu0 %v1742
    %v1813 = vpop.f32.mrb[0].mxu0
    %v1814 = vadd.f32 0.0, %v1813
    %v1815 = vpop.f32.mrb[0].mxu0
    %1816 = vmatprep.mubr.f32.mxu0 0.0
    %1817 = vmatmul.mubr.f32.gmra.mrb[0].mxu0 %v1745
    %v1818 = vpop.f32.mrb[0].mxu0
    %v1819 = vadd.f32 0.0, %v1818
    %v1820 = vpop.f32.mrb[0].mxu0
    %1821 = vdwg.mxu0
    %v1823 = vsel %vm229, %v1533, 0
    %v1826 = vsel %vm229, %v1538, 0
    %1828 = vmatprep.subr.mxu0 0.0
    %1829 = vmatpush1.msra.mxu0 %v224
    %1830 = vmatprep.subr.mxu0 0.0
    %1831 = vmatpush1.msra.mxu0 0.0
    %1832 = vmatprep.subr.mxu0 0.0
    %1833 = vmatpush1.msra.mxu0 0.0
    %1834 = vmatprep.subr.mxu0 0.0
    %1835 = vmatpush1.msra.mxu0 0.0
    %1836 = vmatprep.subr.mxu0 0.0
    %1837 = vmatpush1.msra.mxu0 0.0
    %1838 = vmatprep.subr.mxu0 0.0
    %1839 = vmatpush1.msra.mxu0 0.0
    %1840 = vmatprep.subr.mxu0 0.0
    %1841 = vmatpush1.msra.mxu0 0.0
    %1842 = vmatprep.subr.mxu0 0.0
    %1843 = vmatpush1.msra.mxu0 0.0
    %1844 = vmatprep.subr.mxu0 0.0
    %1845 = vmatpush1.msra.mxu0 0.0
    %1846 = vmatprep.subr.mxu0 0.0
    %1847 = vmatpush1.msra.mxu0 0.0
    %1848 = vmatprep.subr.mxu0 0.0
    %1849 = vmatpush1.msra.mxu0 0.0
    %1850 = vmatprep.subr.mxu0 0.0
    %1851 = vmatpush1.msra.mxu0 0.0
    %1852 = vmatprep.subr.mxu0 0.0
    %1853 = vmatpush1.msra.mxu0 0.0
    %1854 = vmatprep.subr.mxu0 0.0
    %1855 = vmatpush1.msra.mxu0 0.0
    %1856 = vmatprep.subr.mxu0 0.0
    %1857 = vmatpush1.msra.mxu0 0.0
    %1858 = vmatprep.subr.mxu0 0.0
    %1859 = vmatpush1.msra.mxu0 0.0
    %1860 = vmatprep.subr.mxu0 0.0
    %1861 = vmatpush1.msra.mxu0 0.0
    %1862 = vmatprep.subr.mxu0 0.0
    %1863 = vmatpush1.msra.mxu0 0.0
    %1864 = vmatprep.subr.mxu0 0.0
    %1865 = vmatpush1.msra.mxu0 0.0
    %1866 = vmatprep.subr.mxu0 0.0
    %1867 = vmatpush1.msra.mxu0 0.0
    %1868 = vmatprep.subr.mxu0 0.0
    %1869 = vmatpush1.msra.mxu0 0.0
    %1870 = vmatprep.subr.mxu0 0.0
    %1871 = vmatpush1.msra.mxu0 0.0
    %1872 = vmatprep.subr.mxu0 0.0
    %1873 = vmatpush1.msra.mxu0 0.0
    %1874 = vmatprep.subr.mxu0 0.0
    %1875 = vmatpush1.msra.mxu0 0.0
    %1876 = vmatprep.subr.mxu0 0.0
    %1877 = vmatpush1.msra.mxu0 0.0
    %1878 = vmatprep.subr.mxu0 0.0
    %1879 = vmatpush1.msra.mxu0 0.0
    %1880 = vmatprep.subr.mxu0 0.0
    %1881 = vmatpush1.msra.mxu0 0.0
    %1882 = vmatprep.subr.mxu0 0.0
    %1883 = vmatpush1.msra.mxu0 0.0
    %1884 = vmatprep.subr.mxu0 0.0
    %1885 = vmatpush1.msra.mxu0 0.0
    %1886 = vmatprep.subr.mxu0 0.0
    %1887 = vmatpush1.msra.mxu0 0.0
    %1888 = vmatprep.subr.mxu0 0.0
    %1889 = vmatpush1.msra.mxu0 0.0
    %1890 = vmatprep.subr.mxu0 0.0
    %1891 = vmatpush1.msra.mxu0 0.0
    %1892 = vmatprep.mubr.f32.mxu0 0.0
    %1893 = vmatmul.mubr.f32.gmra.mrb[0].mxu0 %v1823
    %v1894 = vpop.f32.mrb[0].mxu0
    %v1895 = vadd.f32 %v1814, %v1894
    %v1896 = vpop.f32.mrb[0].mxu0
    %1897 = vmatprep.mubr.f32.mxu0 0.0
    %1898 = vmatmul.mubr.f32.gmra.mrb[0].mxu0 %v1826
    %v1899 = vpop.f32.mrb[0].mxu0
    %v1900 = vadd.f32 %v1819, %v1899
    %v1901 = vpop.f32.mrb[0].mxu0
    %1902 = vdwg.mxu0
    %1903 = vrot.lane.b32.xlu0 %v171, 112
    %v1904 = vpop.permute.xlu0 %1903
    %1905 = vrot.lane.b32.xlu0 %v176, 112
    %v1906 = vpop.permute.xlu0 %1905
    %1907 = vrot.lane.b32.xlu0 %v171, 80
    %v1908 = vpop.permute.xlu0 %1907
    %1909 = vrot.lane.b32.xlu0 %v176, 80
    %v1910 = vpop.permute.xlu0 %1909
    %v1911 = vsel %vm229, %v1904, 0
    %v1913 = vsel %vm229, %v1906, 0
    %v1915 = vsel %vm229, %v1908, 0
    %v1917 = vsel %vm229, %v1910, 0
    %1919 = vmatprep.subr.mxu0 0.0
    %1920 = vmatpush1.xpose.msra.mxu0 %v1915
    %1921 = vmatprep.subr.mxu0 0.0
    %1922 = vmatpush1.xpose.msra.mxu0 %v1917
    %1923 = vmatprep.subr.mxu0 0.0
    %1924 = vmatpush1.xpose.msra.mxu0 0.0
    %1925 = vmatprep.subr.mxu0 0.0
    %1926 = vmatpush1.xpose.msra.mxu0 0.0
    %1927 = vmatprep.subr.mxu0 0.0
    %1928 = vmatpush1.xpose.msra.mxu0 0.0
    %1929 = vmatprep.subr.mxu0 0.0
    %1930 = vmatpush1.xpose.msra.mxu0 0.0
    %1931 = vmatprep.subr.mxu0 0.0
    %1932 = vmatpush1.xpose.msra.mxu0 0.0
    %1933 = vmatprep.subr.mxu0 0.0
    %1934 = vmatpush1.xpose.msra.mxu0 0.0
    %1935 = vmatprep.subr.mxu0 0.0
    %1936 = vmatpush1.xpose.msra.mxu0 0.0
    %1937 = vmatprep.subr.mxu0 0.0
    %1938 = vmatpush1.xpose.msra.mxu0 0.0
    %1939 = vmatprep.subr.mxu0 0.0
    %1940 = vmatpush1.xpose.msra.mxu0 0.0
    %1941 = vmatprep.subr.mxu0 0.0
    %1942 = vmatpush1.xpose.msra.mxu0 0.0
    %1943 = vmatprep.subr.mxu0 0.0
    %1944 = vmatpush1.xpose.msra.mxu0 0.0
    %1945 = vmatprep.subr.mxu0 0.0
    %1946 = vmatpush1.xpose.msra.mxu0 0.0
    %1947 = vmatprep.subr.mxu0 0.0
    %1948 = vmatpush1.xpose.msra.mxu0 0.0
    %1949 = vmatprep.subr.mxu0 0.0
    %1950 = vmatpush1.xpose.msra.mxu0 0.0
    %1951 = vmatprep.subr.mxu0 0.0
    %1952 = vmatpush1.xpose.msra.mxu0 0.0
    %1953 = vmatprep.subr.mxu0 0.0
    %1954 = vmatpush1.xpose.msra.mxu0 0.0
    %1955 = vmatprep.subr.mxu0 0.0
    %1956 = vmatpush1.xpose.msra.mxu0 0.0
    %1957 = vmatprep.subr.mxu0 0.0
    %1958 = vmatpush1.xpose.msra.mxu0 0.0
    %1959 = vmatprep.subr.mxu0 0.0
    %1960 = vmatpush1.xpose.msra.mxu0 0.0
    %1961 = vmatprep.subr.mxu0 0.0
    %1962 = vmatpush1.xpose.msra.mxu0 0.0
    %1963 = vmatprep.subr.mxu0 0.0
    %1964 = vmatpush1.xpose.msra.mxu0 0.0
    %1965 = vmatprep.subr.mxu0 0.0
    %1966 = vmatpush1.xpose.msra.mxu0 0.0
    %1967 = vmatprep.subr.mxu0 0.0
    %1968 = vmatpush1.xpose.msra.mxu0 0.0
    %1969 = vmatprep.subr.mxu0 0.0
    %1970 = vmatpush1.xpose.msra.mxu0 0.0
    %1971 = vmatprep.subr.mxu0 0.0
    %1972 = vmatpush1.xpose.msra.mxu0 0.0
    %1973 = vmatprep.subr.mxu0 0.0
    %1974 = vmatpush1.xpose.msra.mxu0 0.0
    %1975 = vmatprep.subr.mxu0 0.0
    %1976 = vmatpush1.xpose.msra.mxu0 0.0
    %1977 = vmatprep.subr.mxu0 0.0
    %1978 = vmatpush1.xpose.msra.mxu0 0.0
    %1979 = vmatprep.subr.mxu0 0.0
    %1980 = vmatpush1.xpose.msra.mxu0 0.0
    %1981 = vmatprep.subr.mxu0 0.0
    %1982 = vmatpush1.xpose.msra.mxu0 0.0
    %1983 = vmatprep.mubr.f32.mxu0 0.0
    %1984 = vmatmul.mubr.f32.gmra.mrb[0].mxu0 %v1911
    %v1985 = vpop.f32.mrb[0].mxu0
    %v1986 = vadd.f32 %v222, %v1985
    %v1987 = vpop.f32.mrb[0].mxu0
    %1988 = vmatprep.mubr.f32.mxu0 0.0
    %1989 = vmatmul.mubr.f32.gmra.mrb[0].mxu0 %v1913
    %v1990 = vpop.f32.mrb[0].mxu0
    %v1991 = vadd.f32 %v223, %v1990
    %v1992 = vpop.f32.mrb[0].mxu0
    %1993 = vdwg.mxu0
    %v1994 = vsel %vm313, %v1986, -inf
    %1995 = vmax.xlane.f32.xlu0 %v1994
    %v1996 = vpop.xlane.xlu0 %1995
    %v1997 = vsel %vm313, %v1991, -inf
    %1998 = vmax.xlane.f32.xlu0 %v1997
    %v1999 = vpop.xlane.xlu0 %1998
    %v2000 = vsub.f32 %v1986, %v1996
    %v2001 = vsub.f32 %v1991, %v1999
    %v2002 = vmul.f32 %v2000, 1.442695
    %v2003 = vpow.pop %v2002
    %v2004 = vmul.f32 %v2001, 1.442695
    %v2005 = vpow.pop %v2004
    %v2006 = vsel %vm313, %v2003, 0.0
    %2007 = vadd.xlane.f32.xlu0 %v2006
    %v2008 = vpop.xlane.xlu0 %2007
    %v2009 = vsel %vm313, %v2005, 0.0
    %2010 = vadd.xlane.f32.xlu0 %v2009
    %v2011 = vpop.xlane.xlu0 %2010
    %v2012 = vrcp.pop %v2008
    %v2013 = vmul.f32 %v2003, %v2012
    %v2014 = vrcp.pop %v2011
    %v2015 = vmul.f32 %v2005, %v2014
    %2016 = vrot.lane.b32.xlu0 %v171, 48
    %v2017 = vpop.permute.xlu0 %2016
    %2018 = vrot.lane.b32.xlu0 %v176, 48
    %v2019 = vpop.permute.xlu0 %2018
    %v2023 = vsel %vm313, %v2013, 0
    %v2026 = vsel %vm313, %v2015, 0
    %2028 = vmatprep.subr.mxu0 0.0
    %2029 = vmatpush1.msra.mxu0 %v2017
    %2030 = vmatprep.subr.mxu0 0.0
    %2031 = vmatpush1.msra.mxu0 %v2019
    %2032 = vmatprep.subr.mxu0 0.0
    %2033 = vmatpush1.msra.mxu0 0.0
    %2034 = vmatprep.subr.mxu0 0.0
    %2035 = vmatpush1.msra.mxu0 0.0
    %2036 = vmatprep.subr.mxu0 0.0
    %2037 = vmatpush1.msra.mxu0 0.0
    %2038 = vmatprep.subr.mxu0 0.0
    %2039 = vmatpush1.msra.mxu0 0.0
    %2040 = vmatprep.subr.mxu0 0.0
    %2041 = vmatpush1.msra.mxu0 0.0
    %2042 = vmatprep.subr.mxu0 0.0
    %2043 = vmatpush1.msra.mxu0 0.0
    %2044 = vmatprep.subr.mxu0 0.0
    %2045 = vmatpush1.msra.mxu0 0.0
    %2046 = vmatprep.subr.mxu0 0.0
    %2047 = vmatpush1.msra.mxu0 0.0
    %2048 = vmatprep.subr.mxu0 0.0
    %2049 = vmatpush1.msra.mxu0 0.0
    %2050 = vmatprep.subr.mxu0 0.0
    %2051 = vmatpush1.msra.mxu0 0.0
    %2052 = vmatprep.subr.mxu0 0.0
    %2053 = vmatpush1.msra.mxu0 0.0
    %2054 = vmatprep.subr.mxu0 0.0
    %2055 = vmatpush1.msra.mxu0 0.0
    %2056 = vmatprep.subr.mxu0 0.0
    %2057 = vmatpush1.msra.mxu0 0.0
    %2058 = vmatprep.subr.mxu0 0.0
    %2059 = vmatpush1.msra.mxu0 0.0
    %2060 = vmatprep.subr.mxu0 0.0
    %2061 = vmatpush1.msra.mxu0 0.0
    %2062 = vmatprep.subr.mxu0 0.0
    %2063 = vmatpush1.msra.mxu0 0.0
    %2064 = vmatprep.subr.mxu0 0.0
    %2065 = vmatpush1.msra.mxu0 0.0
    %2066 = vmatprep.subr.mxu0 0.0
    %2067 = vmatpush1.msra.mxu0 0.0
    %2068 = vmatprep.subr.mxu0 0.0
    %2069 = vmatpush1.msra.mxu0 0.0
    %2070 = vmatprep.subr.mxu0 0.0
    %2071 = vmatpush1.msra.mxu0 0.0
    %2072 = vmatprep.subr.mxu0 0.0
    %2073 = vmatpush1.msra.mxu0 0.0
    %2074 = vmatprep.subr.mxu0 0.0
    %2075 = vmatpush1.msra.mxu0 0.0
    %2076 = vmatprep.subr.mxu0 0.0
    %2077 = vmatpush1.msra.mxu0 0.0
    %2078 = vmatprep.subr.mxu0 0.0
    %2079 = vmatpush1.msra.mxu0 0.0
    %2080 = vmatprep.subr.mxu0 0.0
    %2081 = vmatpush1.msra.mxu0 0.0
    %2082 = vmatprep.subr.mxu0 0.0
    %2083 = vmatpush1.msra.mxu0 0.0
    %2084 = vmatprep.subr.mxu0 0.0
    %2085 = vmatpush1.msra.mxu0 0.0
    %2086 = vmatprep.subr.mxu0 0.0
    %2087 = vmatpush1.msra.mxu0 0.0
    %2088 = vmatprep.subr.mxu0 0.0
    %2089 = vmatpush1.msra.mxu0 0.0
    %2090 = vmatprep.subr.mxu0 0.0
    %2091 = vmatpush1.msra.mxu0 0.0
    %2092 = vmatprep.mubr.f32.mxu0 0.0
    %2093 = vmatmul.mubr.f32.gmra.mrb[0].mxu0 %v2023
    %v2094 = vpop.f32.mrb[0].mxu0
    %v2095 = vadd.f32 0.0, %v2094
    %v2096 = vpop.f32.mrb[0].mxu0
    %2097 = vmatprep.mubr.f32.mxu0 0.0
    %2098 = vmatmul.mubr.f32.gmra.mrb[0].mxu0 %v2026
    %v2099 = vpop.f32.mrb[0].mxu0
    %v2100 = vadd.f32 0.0, %v2099
    %v2101 = vpop.f32.mrb[0].mxu0
    %2102 = vdwg.mxu0
    %v2104 = vsel %vm229, %v2095, 0
    %v2107 = vsel %vm229, %v2100, 0
    %2109 = vmatprep.subr.mxu0 0.0
    %2110 = vmatpush1.msra.mxu0 %v226
    %2111 = vmatprep.subr.mxu0 0.0
    %2112 = vmatpush1.msra.mxu0 0.0
    %2113 = vmatprep.subr.mxu0 0.0
    %2114 = vmatpush1.msra.mxu0 0.0
    %2115 = vmatprep.subr.mxu0 0.0
    %2116 = vmatpush1.msra.mxu0 0.0
    %2117 = vmatprep.subr.mxu0 0.0
    %2118 = vmatpush1.msra.mxu0 0.0
    %2119 = vmatprep.subr.mxu0 0.0
    %2120 = vmatpush1.msra.mxu0 0.0
    %2121 = vmatprep.subr.mxu0 0.0
    %2122 = vmatpush1.msra.mxu0 0.0
    %2123 = vmatprep.subr.mxu0 0.0
    %2124 = vmatpush1.msra.mxu0 0.0
    %2125 = vmatprep.subr.mxu0 0.0
    %2126 = vmatpush1.msra.mxu0 0.0
    %2127 = vmatprep.subr.mxu0 0.0
    %2128 = vmatpush1.msra.mxu0 0.0
    %2129 = vmatprep.subr.mxu0 0.0
    %2130 = vmatpush1.msra.mxu0 0.0
    %2131 = vmatprep.subr.mxu0 0.0
    %2132 = vmatpush1.msra.mxu0 0.0
    %2133 = vmatprep.subr.mxu0 0.0
    %2134 = vmatpush1.msra.mxu0 0.0
    %2135 = vmatprep.subr.mxu0 0.0
    %2136 = vmatpush1.msra.mxu0 0.0
    %2137 = vmatprep.subr.mxu0 0.0
    %2138 = vmatpush1.msra.mxu0 0.0
    %2139 = vmatprep.subr.mxu0 0.0
    %2140 = vmatpush1.msra.mxu0 0.0
    %2141 = vmatprep.subr.mxu0 0.0
    %2142 = vmatpush1.msra.mxu0 0.0
    %2143 = vmatprep.subr.mxu0 0.0
    %2144 = vmatpush1.msra.mxu0 0.0
    %2145 = vmatprep.subr.mxu0 0.0
    %2146 = vmatpush1.msra.mxu0 0.0
    %2147 = vmatprep.subr.mxu0 0.0
    %2148 = vmatpush1.msra.mxu0 0.0
    %2149 = vmatprep.subr.mxu0 0.0
    %2150 = vmatpush1.msra.mxu0 0.0
    %2151 = vmatprep.subr.mxu0 0.0
    %2152 = vmatpush1.msra.mxu0 0.0
    %2153 = vmatprep.subr.mxu0 0.0
    %2154 = vmatpush1.msra.mxu0 0.0
    %2155 = vmatprep.subr.mxu0 0.0
    %2156 = vmatpush1.msra.mxu0 0.0
    %2157 = vmatprep.subr.mxu0 0.0
    %2158 = vmatpush1.msra.mxu0 0.0
    %2159 = vmatprep.subr.mxu0 0.0
    %2160 = vmatpush1.msra.mxu0 0.0
    %2161 = vmatprep.subr.mxu0 0.0
    %2162 = vmatpush1.msra.mxu0 0.0
    %2163 = vmatprep.subr.mxu0 0.0
    %2164 = vmatpush1.msra.mxu0 0.0
    %2165 = vmatprep.subr.mxu0 0.0
    %2166 = vmatpush1.msra.mxu0 0.0
    %2167 = vmatprep.subr.mxu0 0.0
    %2168 = vmatpush1.msra.mxu0 0.0
    %2169 = vmatprep.subr.mxu0 0.0
    %2170 = vmatpush1.msra.mxu0 0.0
    %2171 = vmatprep.subr.mxu0 0.0
    %2172 = vmatpush1.msra.mxu0 0.0
    %2173 = vmatprep.mubr.f32.mxu0 0.0
    %2174 = vmatmul.mubr.f32.gmra.mrb[0].mxu0 %v2104
    %v2175 = vpop.f32.mrb[0].mxu0
    %v2176 = vadd.f32 0.0, %v2175
    %v2177 = vpop.f32.mrb[0].mxu0
    %2178 = vmatprep.mubr.f32.mxu0 0.0
    %2179 = vmatmul.mubr.f32.gmra.mrb[0].mxu0 %v2107
    %v2180 = vpop.f32.mrb[0].mxu0
    %v2181 = vadd.f32 0.0, %v2180
    %v2182 = vpop.f32.mrb[0].mxu0
    %2183 = vdwg.mxu0
    %v2184 = vadd.f32 %v1895, %v2176
    %v2185 = vadd.f32 %v1900, %v2181
    %2186 = vrot.lane.b32.xlu0 %v171, 104
    %v2187 = vpop.permute.xlu0 %2186
    %2188 = vrot.lane.b32.xlu0 %v176, 104
    %v2189 = vpop.permute.xlu0 %2188
    %2190 = vrot.lane.b32.xlu0 %v171, 72
    %v2191 = vpop.permute.xlu0 %2190
    %2192 = vrot.lane.b32.xlu0 %v176, 72
    %v2193 = vpop.permute.xlu0 %2192
    %v2194 = vsel %vm229, %v2187, 0
    %v2196 = vsel %vm229, %v2189, 0
    %v2198 = vsel %vm229, %v2191, 0
    %v2200 = vsel %vm229, %v2193, 0
    %2202 = vmatprep.subr.mxu0 0.0
    %2203 = vmatpush1.xpose.msra.mxu0 %v2198
    %2204 = vmatprep.subr.mxu0 0.0
    %2205 = vmatpush1.xpose.msra.mxu0 %v2200
    %2206 = vmatprep.subr.mxu0 0.0
    %2207 = vmatpush1.xpose.msra.mxu0 0.0
    %2208 = vmatprep.subr.mxu0 0.0
    %2209 = vmatpush1.xpose.msra.mxu0 0.0
    %2210 = vmatprep.subr.mxu0 0.0
    %2211 = vmatpush1.xpose.msra.mxu0 0.0
    %2212 = vmatprep.subr.mxu0 0.0
    %2213 = vmatpush1.xpose.msra.mxu0 0.0
    %2214 = vmatprep.subr.mxu0 0.0
    %2215 = vmatpush1.xpose.msra.mxu0 0.0
    %2216 = vmatprep.subr.mxu0 0.0
    %2217 = vmatpush1.xpose.msra.mxu0 0.0
    %2218 = vmatprep.subr.mxu0 0.0
    %2219 = vmatpush1.xpose.msra.mxu0 0.0
    %2220 = vmatprep.subr.mxu0 0.0
    %2221 = vmatpush1.xpose.msra.mxu0 0.0
    %2222 = vmatprep.subr.mxu0 0.0
    %2223 = vmatpush1.xpose.msra.mxu0 0.0
    %2224 = vmatprep.subr.mxu0 0.0
    %2225 = vmatpush1.xpose.msra.mxu0 0.0
    %2226 = vmatprep.subr.mxu0 0.0
    %2227 = vmatpush1.xpose.msra.mxu0 0.0
    %2228 = vmatprep.subr.mxu0 0.0
    %2229 = vmatpush1.xpose.msra.mxu0 0.0
    %2230 = vmatprep.subr.mxu0 0.0
    %2231 = vmatpush1.xpose.msra.mxu0 0.0
    %2232 = vmatprep.subr.mxu0 0.0
    %2233 = vmatpush1.xpose.msra.mxu0 0.0
    %2234 = vmatprep.subr.mxu0 0.0
    %2235 = vmatpush1.xpose.msra.mxu0 0.0
    %2236 = vmatprep.subr.mxu0 0.0
    %2237 = vmatpush1.xpose.msra.mxu0 0.0
    %2238 = vmatprep.subr.mxu0 0.0
    %2239 = vmatpush1.xpose.msra.mxu0 0.0
    %2240 = vmatprep.subr.mxu0 0.0
    %2241 = vmatpush1.xpose.msra.mxu0 0.0
    %2242 = vmatprep.subr.mxu0 0.0
    %2243 = vmatpush1.xpose.msra.mxu0 0.0
    %2244 = vmatprep.subr.mxu0 0.0
    %2245 = vmatpush1.xpose.msra.mxu0 0.0
    %2246 = vmatprep.subr.mxu0 0.0
    %2247 = vmatpush1.xpose.msra.mxu0 0.0
    %2248 = vmatprep.subr.mxu0 0.0
    %2249 = vmatpush1.xpose.msra.mxu0 0.0
    %2250 = vmatprep.subr.mxu0 0.0
    %2251 = vmatpush1.xpose.msra.mxu0 0.0
    %2252 = vmatprep.subr.mxu0 0.0
    %2253 = vmatpush1.xpose.msra.mxu0 0.0
    %2254 = vmatprep.subr.mxu0 0.0
    %2255 = vmatpush1.xpose.msra.mxu0 0.0
    %2256 = vmatprep.subr.mxu0 0.0
    %2257 = vmatpush1.xpose.msra.mxu0 0.0
    %2258 = vmatprep.subr.mxu0 0.0
    %2259 = vmatpush1.xpose.msra.mxu0 0.0
    %2260 = vmatprep.subr.mxu0 0.0
    %2261 = vmatpush1.xpose.msra.mxu0 0.0
    %2262 = vmatprep.subr.mxu0 0.0
    %2263 = vmatpush1.xpose.msra.mxu0 0.0
    %2264 = vmatprep.subr.mxu0 0.0
    %2265 = vmatpush1.xpose.msra.mxu0 0.0
    %2266 = vmatprep.mubr.f32.mxu0 0.0
    %2267 = vmatmul.mubr.f32.gmra.mrb[0].mxu0 %v2194
    %v2268 = vpop.f32.mrb[0].mxu0
    %v2269 = vadd.f32 %v222, %v2268
    %v2270 = vpop.f32.mrb[0].mxu0
    %2271 = vmatprep.mubr.f32.mxu0 0.0
    %2272 = vmatmul.mubr.f32.gmra.mrb[0].mxu0 %v2196
    %v2273 = vpop.f32.mrb[0].mxu0
    %v2274 = vadd.f32 %v223, %v2273
    %v2275 = vpop.f32.mrb[0].mxu0
    %2276 = vdwg.mxu0
    %v2277 = vsel %vm313, %v2269, -inf
    %2278 = vmax.xlane.f32.xlu0 %v2277
    %v2279 = vpop.xlane.xlu0 %2278
    %v2280 = vsel %vm313, %v2274, -inf
    %2281 = vmax.xlane.f32.xlu0 %v2280
    %v2282 = vpop.xlane.xlu0 %2281
    %v2283 = vsub.f32 %v2269, %v2279
    %v2284 = vsub.f32 %v2274, %v2282
    %v2285 = vmul.f32 %v2283, 1.442695
    %v2286 = vpow.pop %v2285
    %v2287 = vmul.f32 %v2284, 1.442695
    %v2288 = vpow.pop %v2287
    %v2289 = vsel %vm313, %v2286, 0.0
    %2290 = vadd.xlane.f32.xlu0 %v2289
    %v2291 = vpop.xlane.xlu0 %2290
    %v2292 = vsel %vm313, %v2288, 0.0
    %2293 = vadd.xlane.f32.xlu0 %v2292
    %v2294 = vpop.xlane.xlu0 %2293
    %v2295 = vrcp.pop %v2291
    %v2296 = vmul.f32 %v2286, %v2295
    %v2297 = vrcp.pop %v2294
    %v2298 = vmul.f32 %v2288, %v2297
    %2299 = vrot.lane.b32.xlu0 %v171, 40
    %v2300 = vpop.permute.xlu0 %2299
    %2301 = vrot.lane.b32.xlu0 %v176, 40
    %v2302 = vpop.permute.xlu0 %2301
    %v2306 = vsel %vm313, %v2296, 0
    %v2309 = vsel %vm313, %v2298, 0
    %2311 = vmatprep.subr.mxu0 0.0
    %2312 = vmatpush1.msra.mxu0 %v2300
    %2313 = vmatprep.subr.mxu0 0.0
    %2314 = vmatpush1.msra.mxu0 %v2302
    %2315 = vmatprep.subr.mxu0 0.0
    %2316 = vmatpush1.msra.mxu0 0.0
    %2317 = vmatprep.subr.mxu0 0.0
    %2318 = vmatpush1.msra.mxu0 0.0
    %2319 = vmatprep.subr.mxu0 0.0
    %2320 = vmatpush1.msra.mxu0 0.0
    %2321 = vmatprep.subr.mxu0 0.0
    %2322 = vmatpush1.msra.mxu0 0.0
    %2323 = vmatprep.subr.mxu0 0.0
    %2324 = vmatpush1.msra.mxu0 0.0
    %2325 = vmatprep.subr.mxu0 0.0
    %2326 = vmatpush1.msra.mxu0 0.0
    %2327 = vmatprep.subr.mxu0 0.0
    %2328 = vmatpush1.msra.mxu0 0.0
    %2329 = vmatprep.subr.mxu0 0.0
    %2330 = vmatpush1.msra.mxu0 0.0
    %2331 = vmatprep.subr.mxu0 0.0
    %2332 = vmatpush1.msra.mxu0 0.0
    %2333 = vmatprep.subr.mxu0 0.0
    %2334 = vmatpush1.msra.mxu0 0.0
    %2335 = vmatprep.subr.mxu0 0.0
    %2336 = vmatpush1.msra.mxu0 0.0
    %2337 = vmatprep.subr.mxu0 0.0
    %2338 = vmatpush1.msra.mxu0 0.0
    %2339 = vmatprep.subr.mxu0 0.0
    %2340 = vmatpush1.msra.mxu0 0.0
    %2341 = vmatprep.subr.mxu0 0.0
    %2342 = vmatpush1.msra.mxu0 0.0
    %2343 = vmatprep.subr.mxu0 0.0
    %2344 = vmatpush1.msra.mxu0 0.0
    %2345 = vmatprep.subr.mxu0 0.0
    %2346 = vmatpush1.msra.mxu0 0.0
    %2347 = vmatprep.subr.mxu0 0.0
    %2348 = vmatpush1.msra.mxu0 0.0
    %2349 = vmatprep.subr.mxu0 0.0
    %2350 = vmatpush1.msra.mxu0 0.0
    %2351 = vmatprep.subr.mxu0 0.0
    %2352 = vmatpush1.msra.mxu0 0.0
    %2353 = vmatprep.subr.mxu0 0.0
    %2354 = vmatpush1.msra.mxu0 0.0
    %2355 = vmatprep.subr.mxu0 0.0
    %2356 = vmatpush1.msra.mxu0 0.0
    %2357 = vmatprep.subr.mxu0 0.0
    %2358 = vmatpush1.msra.mxu0 0.0
    %2359 = vmatprep.subr.mxu0 0.0
    %2360 = vmatpush1.msra.mxu0 0.0
    %2361 = vmatprep.subr.mxu0 0.0
    %2362 = vmatpush1.msra.mxu0 0.0
    %2363 = vmatprep.subr.mxu0 0.0
    %2364 = vmatpush1.msra.mxu0 0.0
    %2365 = vmatprep.subr.mxu0 0.0
    %2366 = vmatpush1.msra.mxu0 0.0
    %2367 = vmatprep.subr.mxu0 0.0
    %2368 = vmatpush1.msra.mxu0 0.0
    %2369 = vmatprep.subr.mxu0 0.0
    %2370 = vmatpush1.msra.mxu0 0.0
    %2371 = vmatprep.subr.mxu0 0.0
    %2372 = vmatpush1.msra.mxu0 0.0
    %2373 = vmatprep.subr.mxu0 0.0
    %2374 = vmatpush1.msra.mxu0 0.0
    %2375 = vmatprep.mubr.f32.mxu0 0.0
    %2376 = vmatmul.mubr.f32.gmra.mrb[0].mxu0 %v2306
    %v2377 = vpop.f32.mrb[0].mxu0
    %v2378 = vadd.f32 0.0, %v2377
    %v2379 = vpop.f32.mrb[0].mxu0
    %2380 = vmatprep.mubr.f32.mxu0 0.0
    %2381 = vmatmul.mubr.f32.gmra.mrb[0].mxu0 %v2309
    %v2382 = vpop.f32.mrb[0].mxu0
    %v2383 = vadd.f32 0.0, %v2382
    %v2384 = vpop.f32.mrb[0].mxu0
    %2385 = vdwg.mxu0
    %v2387 = vsel %vm229, %v2378, 0
    %v2390 = vsel %vm229, %v2383, 0
    %2392 = vmatprep.subr.mxu0 0.0
    %2393 = vmatpush1.msra.mxu0 %v227
    %2394 = vmatprep.subr.mxu0 0.0
    %2395 = vmatpush1.msra.mxu0 0.0
    %2396 = vmatprep.subr.mxu0 0.0
    %2397 = vmatpush1.msra.mxu0 0.0
    %2398 = vmatprep.subr.mxu0 0.0
    %2399 = vmatpush1.msra.mxu0 0.0
    %2400 = vmatprep.subr.mxu0 0.0
    %2401 = vmatpush1.msra.mxu0 0.0
    %2402 = vmatprep.subr.mxu0 0.0
    %2403 = vmatpush1.msra.mxu0 0.0
    %2404 = vmatprep.subr.mxu0 0.0
    %2405 = vmatpush1.msra.mxu0 0.0
    %2406 = vmatprep.subr.mxu0 0.0
    %2407 = vmatpush1.msra.mxu0 0.0
    %2408 = vmatprep.subr.mxu0 0.0
    %2409 = vmatpush1.msra.mxu0 0.0
    %2410 = vmatprep.subr.mxu0 0.0
    %2411 = vmatpush1.msra.mxu0 0.0
    %2412 = vmatprep.subr.mxu0 0.0
    %2413 = vmatpush1.msra.mxu0 0.0
    %2414 = vmatprep.subr.mxu0 0.0
    %2415 = vmatpush1.msra.mxu0 0.0
    %2416 = vmatprep.subr.mxu0 0.0
    %2417 = vmatpush1.msra.mxu0 0.0
    %2418 = vmatprep.subr.mxu0 0.0
    %2419 = vmatpush1.msra.mxu0 0.0
    %2420 = vmatprep.subr.mxu0 0.0
    %2421 = vmatpush1.msra.mxu0 0.0
    %2422 = vmatprep.subr.mxu0 0.0
    %2423 = vmatpush1.msra.mxu0 0.0
    %2424 = vmatprep.subr.mxu0 0.0
    %2425 = vmatpush1.msra.mxu0 0.0
    %2426 = vmatprep.subr.mxu0 0.0
    %2427 = vmatpush1.msra.mxu0 0.0
    %2428 = vmatprep.subr.mxu0 0.0
    %2429 = vmatpush1.msra.mxu0 0.0
    %2430 = vmatprep.subr.mxu0 0.0
    %2431 = vmatpush1.msra.mxu0 0.0
    %2432 = vmatprep.subr.mxu0 0.0
    %2433 = vmatpush1.msra.mxu0 0.0
    %2434 = vmatprep.subr.mxu0 0.0
    %2435 = vmatpush1.msra.mxu0 0.0
    %2436 = vmatprep.subr.mxu0 0.0
    %2437 = vmatpush1.msra.mxu0 0.0
    %2438 = vmatprep.subr.mxu0 0.0
    %2439 = vmatpush1.msra.mxu0 0.0
    %2440 = vmatprep.subr.mxu0 0.0
    %2441 = vmatpush1.msra.mxu0 0.0
    %2442 = vmatprep.subr.mxu0 0.0
    %2443 = vmatpush1.msra.mxu0 0.0
    %2444 = vmatprep.subr.mxu0 0.0
    %2445 = vmatpush1.msra.mxu0 0.0
    %2446 = vmatprep.subr.mxu0 0.0
    %2447 = vmatpush1.msra.mxu0 0.0
    %2448 = vmatprep.subr.mxu0 0.0
    %2449 = vmatpush1.msra.mxu0 0.0
    %2450 = vmatprep.subr.mxu0 0.0
    %2451 = vmatpush1.msra.mxu0 0.0
    %2452 = vmatprep.subr.mxu0 0.0
    %2453 = vmatpush1.msra.mxu0 0.0
    %2454 = vmatprep.subr.mxu0 0.0
    %2455 = vmatpush1.msra.mxu0 0.0
    %2456 = vmatprep.mubr.f32.mxu0 0.0
    %2457 = vmatmul.mubr.f32.gmra.mrb[0].mxu0 %v2387
    %v2458 = vpop.f32.mrb[0].mxu0
    %v2459 = vadd.f32 0.0, %v2458
    %v2460 = vpop.f32.mrb[0].mxu0
    %2461 = vmatprep.mubr.f32.mxu0 0.0
    %2462 = vmatmul.mubr.f32.gmra.mrb[0].mxu0 %v2390
    %v2463 = vpop.f32.mrb[0].mxu0
    %v2464 = vadd.f32 0.0, %v2463
    %v2465 = vpop.f32.mrb[0].mxu0
    %2466 = vdwg.mxu0
    %v2467 = vadd.f32 %v2184, %v2459
    %v2468 = vadd.f32 %v2185, %v2464
    %v2469 = vadd.f32 %v2467, %v1349
    %v2470 = vadd.f32 %v2468, %v1349
    %2471 = vst.msk [vmem:[#allocation8 + $0x10] sm:$0xff] %vm81, %v2469
    %2472 = vst.msk [vmem:[#allocation8 + $0x18] sm:$0xff] %vm81, %v2470
    // Predicated region
    $region34: #{tpu_custom_call.1} parent=1 // pred_check
      _
    $region35: #{tpu_custom_call.1} parent=1 // pred_check_branch
      %2474 = sbr.rel (0) target = $region37
    $region36: #{tpu_custom_call.1} parent=1 // pred_region
      %s2476 = ssub.s32 512, 512
      %2477 = vsyncadd [#allocation4], %s2476
      %s2478 = sshll.u32 [#allocation8], 4
      %s2479 = int_to_ptr.vmem [resolvable:$true] %s2478
      %2484 = dma.vmem_to_hbm [thread:$0]  %s2479, 512, %s5, [#allocation4], 128, 128, 8
    $region37: #{tpu_custom_call.1} parent=1 // pred_fallthru
      _
    // Predicated region
    $region38: #{tpu_custom_call.1} parent=1 // pred_check
      _
    $region39: #{tpu_custom_call.1} parent=1 // pred_check_branch
      %2486 = sbr.rel (0) target = $region41
    $region40: #{tpu_custom_call.1} parent=1 // pred_region
      %s2488 = ssub.s32 512, 512
      %2489 = vsyncadd [#allocation10], %s2488
      %s2490 = sshll.u32 [#allocation9], 4
      %s2491 = int_to_ptr.vmem [resolvable:$true] %s2490
      %2496 = dma.vmem_to_hbm [thread:$0]  %s2491, 512, %s6, [#allocation10], 128, 128, 8
    $region41: #{tpu_custom_call.1} parent=1 // pred_fallthru
      _
    // Predicated region
    $region42: #{tpu_custom_call.1} parent=1 // pred_check
      _
    $region43: #{tpu_custom_call.1} parent=1 // pred_check_branch
      %2498 = sbr.rel (0) target = $region45
    $region44: #{tpu_custom_call.1} parent=1 // pred_region
      %s2500 = ssub.s32 512, 512
      %2501 = vsyncadd [#allocation10], %s2500
      %s2502 = sshll.u32 [#allocation11], 4
      %s2503 = int_to_ptr.vmem [resolvable:$true] %s2502
      %2508 = dma.vmem_to_hbm [thread:$0]  %s2503, 512, %s7, [#allocation10], 128, 128, 8
    $region45: #{tpu_custom_call.1} parent=1 // pred_fallthru
      _
    // Predicated region
    $region46: #{tpu_custom_call.1} parent=1 // pred_check
      _
    $region47: #{tpu_custom_call.1} parent=1 // pred_check_branch
      %2510 = sbr.rel (0) target = $region49
    $region48: #{tpu_custom_call.1} parent=1 // pred_region
      %2511 = dma.done [#allocation4], 512
    $region49: #{tpu_custom_call.1} parent=1 // pred_fallthru
      _
    // Predicated region
    $region50: #{tpu_custom_call.1} parent=1 // pred_check
      _
    $region51: #{tpu_custom_call.1} parent=1 // pred_check_branch
      %2513 = sbr.rel (0) target = $region53
    $region52: #{tpu_custom_call.1} parent=1 // pred_region
      %2514 = dma.done [#allocation10], 512
    $region53: #{tpu_custom_call.1} parent=1 // pred_fallthru
      _
    // Predicated region
    $region54: #{tpu_custom_call.1} parent=1 // pred_check
      _
    $region55: #{tpu_custom_call.1} parent=1 // pred_check_branch
      %2516 = sbr.rel (0) target = $region57
    $region56: #{tpu_custom_call.1} parent=1 // pred_region
      %2517 = dma.done [#allocation10], 512
    $region57: #{tpu_custom_call.1} parent=1 // pred_fallthru
      _
    %2518 = vsyncpa [#allocation3], 1
    %2519 = vsyncpa [#allocation6], 1
    %2520 = vsyncpa [#allocation4], 1
    %2521 = vsyncpa [#allocation10], 1

</llo_original>
